<compile_context>
chip_gen: v6e
topology: v6e:2x2x1
jax: 0.10.0
libtpu: 0.0.40
codegen_flags: <defaults>
</compile_context>

<pallas_src>
import functools
import math

import jax
import jax.numpy as jnp
from jax import lax
from jax.experimental import pallas as pl
from jax.experimental.pallas import tpu as pltpu


# ---------------------------------------------------------------------------
# Helpers
# ---------------------------------------------------------------------------

@functools.lru_cache(maxsize=None)
def _vmem_limit_bytes():
    """Scoped VMEM budget: 3/4 of physical per-core VMEM (64 MiB fallback)."""
    try:
        return int(pltpu.get_tpu_info().vmem_capacity_bytes) * 3 // 4
    except Exception:
        return 64 * 1024 * 1024


def _pick_tile(n, cap, align=8):
    """Largest divisor of n that is <= cap and a multiple of `align`.

    Falls back to the full dimension only if no aligned divisor exists
    (block == full dim is always a legal BlockSpec).
    """
    if n <= cap:
        return n
    t = cap
    while t >= align:
        if n % t == 0 and t % align == 0:
            return t
        t -= 1
    return n


# ---------------------------------------------------------------------------
# Tiled matmul (projections): bf16 MXU operands (cast in-kernel), f32 accum
# ---------------------------------------------------------------------------

def _matmul_kernel(x_ref, w_ref, o_ref, acc_ref):
    @pl.when(pl.program_id(2) == 0)
    def _init():
        acc_ref[...] = jnp.zeros(acc_ref.shape, acc_ref.dtype)

    # Cast to bf16 inside the kernel (no extra HBM cast pass in the wrapper).
    acc_ref[...] += jnp.dot(x_ref[...].astype(jnp.bfloat16),
                            w_ref[...].astype(jnp.bfloat16),
                            preferred_element_type=jnp.float32)

    @pl.when(pl.program_id(2) == pl.num_programs(2) - 1)
    def _finalize():
        o_ref[...] = acc_ref[...].astype(o_ref.dtype)


def pallas_matmul(x, w, out_dtype=jnp.float32, tm=512, tn=512, tk=512):
    """x: (M, K), w: (K, N) -> (M, N). bf16 MXU inputs, f32 accumulation."""
    M, K = x.shape
    K2, N = w.shape
    assert K == K2
    tm = _pick_tile(M, tm, align=8)     # sublane dim
    tn = _pick_tile(N, tn, align=128)   # lane dim
    tk = _pick_tile(K, tk, align=128)   # lane dim of x / sublane dim of w
    grid = (M // tm, N // tn, K // tk)

    bytes_accessed = int(
        x.size * x.dtype.itemsize * (N // tn)      # x re-streamed per N tile
        + w.size * w.dtype.itemsize * (M // tm)    # w re-streamed per M tile
        + M * N * jnp.dtype(out_dtype).itemsize)

    return pl.pallas_call(
        _matmul_kernel,
        out_shape=jax.ShapeDtypeStruct((M, N), out_dtype),
        grid=grid,
        in_specs=[
            pl.BlockSpec((tm, tk), lambda i, j, k: (i, k)),
            pl.BlockSpec((tk, tn), lambda i, j, k: (k, j)),
        ],
        out_specs=pl.BlockSpec((tm, tn), lambda i, j, k: (i, j)),
        scratch_shapes=[pltpu.VMEM((tm, tn), jnp.float32)],
        compiler_params=pltpu.CompilerParams(
            dimension_semantics=("parallel", "parallel", "arbitrary"),
            vmem_limit_bytes=_vmem_limit_bytes()),
        cost_estimate=pl.CostEstimate(
            flops=2 * M * N * K, transcendentals=0,
            bytes_accessed=bytes_accessed),
    )(x, w)


# ---------------------------------------------------------------------------
# Flash attention kernel (online softmax), one GQA group per grid point
# ---------------------------------------------------------------------------

def _flash_kernel(q_ref, k_ref, v_ref, o_ref, m_sc, l_sc, acc_sc,
                  *, n_reps, head_dim):
    """Blocks: q/o (1, tq, n_reps*head_dim); k/v (1, tkv, head_dim).

    The softmax scale is folded into wq at parameter-prep time, so q arrives
    pre-scaled.  The n_reps query heads of the group share the resident K/V
    tile (loaded once per group per kv step).
    """
    ki = pl.program_id(2)

    @pl.when(ki == 0)
    def _init():
        m_sc[...] = jnp.full(m_sc.shape, -jnp.inf, m_sc.dtype)
        l_sc[...] = jnp.zeros(l_sc.shape, l_sc.dtype)
        acc_sc[...] = jnp.zeros(acc_sc.shape, acc_sc.dtype)

    k = k_ref[0]                      # (tkv, D) bf16, resident across heads
    v = v_ref[0]                      # (tkv, D) bf16

    for r in range(n_reps):           # static unroll over the GQA group
        q = q_ref[0, :, r * head_dim:(r + 1) * head_dim]          # (tq, D) bf16
        # Contract on head_dim directly (no k.T materialized through the XLU).
        s = lax.dot_general(q, k, (((1,), (1,)), ((), ())),
                            preferred_element_type=jnp.float32)   # (tq, tkv)

        m_prev = m_sc[r]                                          # (tq, 1)
        m_new = jnp.maximum(m_prev, s.max(axis=-1, keepdims=True))
        alpha = jnp.exp(m_prev - m_new)
        # exp stays f32 (v5e has no bf16 EUP); p is cast to bf16 for the MXU.
        p = jnp.exp(s - m_new)
        l_sc[r] = alpha * l_sc[r] + p.sum(axis=-1, keepdims=True)
        acc_sc[r] = alpha * acc_sc[r] + jnp.dot(
            p.astype(v.dtype), v, preferred_element_type=jnp.float32)
        m_sc[r] = m_new

    @pl.when(ki == pl.num_programs(2) - 1)
    def _finalize():
        for r in range(n_reps):
            inv = pl.reciprocal(l_sc[r], approx=False)            # exact
            o_ref[0, :, r * head_dim:(r + 1) * head_dim] = (
                acc_sc[r] * inv).astype(o_ref.dtype)


def flash_attention_gqa(q, k, v, *, n_heads, n_kv_heads, tq=256, tkv=512):
    """Non-causal SDPA with grouped-query attention.

    q: (B, S, n_heads*head_dim) bf16 (softmax scale already folded in).
    k, v: (B, S, n_kv_heads*head_dim) bf16.
    Returns (B, S, n_heads*head_dim) bf16.
    """
    B, S, qsz = q.shape
    head_dim = qsz // n_heads
    n_reps = n_heads // n_kv_heads
    gdim = n_reps * head_dim                       # lane width of one group

    tq = _pick_tile(S, tq, align=8)
    tkv = _pick_tile(S, tkv, align=8)
    grid = (B * n_kv_heads, S // tq, S // tkv)

    kernel = functools.partial(_flash_kernel, n_reps=n_reps, head_dim=head_dim)
    scratch = [
        pltpu.VMEM((n_reps, tq, 1), jnp.float32),         # running max m
        pltpu.VMEM((n_reps, tq, 1), jnp.float32),         # running denom l
        pltpu.VMEM((n_reps, tq, head_dim), jnp.float32),  # output accumulator
    ]
    compiler_params = pltpu.CompilerParams(
        dimension_semantics=("parallel", "parallel", "arbitrary"),
        vmem_limit_bytes=_vmem_limit_bytes())
    cost = pl.CostEstimate(
        flops=4 * B * n_heads * S * S * head_dim,
        transcendentals=B * n_heads * S * S,
        bytes_accessed=int(2 * q.size * 2                      # q read + o write
                           + (k.size + v.size) * 2 * (S // tq)))  # K/V re-stream

    direct = (head_dim % 128 == 0)
    if direct:
        # Lane-dense path: read q/k/v straight from the projection layout and
        # write the output straight into (B, S, H*D) — no transposes anywhere.
        arrs = (q, k, v)
        out_shape = jax.ShapeDtypeStruct((B, S, qsz), jnp.bfloat16)

        def q_map(g, qi, ki):
            return (g // n_kv_heads, qi, g % n_kv_heads)

        def kv_map(g, qi, ki):
            return (g // n_kv_heads, ki, g % n_kv_heads)
    else:
        # Unaligned head_dim (e.g. the tiny demo): make the kv-group a leading
        # axis so every block keeps the FULL lane extent (legal BlockSpec).
        qg = q.reshape(B, S, n_kv_heads, gdim).transpose(0, 2, 1, 3)
        kg = k.reshape(B, S, n_kv_heads, head_dim).transpose(0, 2, 1, 3)
        vg = v.reshape(B, S, n_kv_heads, head_dim).transpose(0, 2, 1, 3)
        arrs = (qg.reshape(B * n_kv_heads, S, gdim),
                kg.reshape(B * n_kv_heads, S, head_dim),
                vg.reshape(B * n_kv_heads, S, head_dim))
        out_shape = jax.ShapeDtypeStruct((B * n_kv_heads, S, gdim), jnp.bfloat16)

        def q_map(g, qi, ki):
            return (g, qi, 0)

        def kv_map(g, qi, ki):
            return (g, ki, 0)

    out = pl.pallas_call(
        kernel,
        out_shape=out_shape,
        grid=grid,
        in_specs=[
            pl.BlockSpec((1, tq, gdim), q_map),
            pl.BlockSpec((1, tkv, head_dim), kv_map),
            pl.BlockSpec((1, tkv, head_dim), kv_map),
        ],
        out_specs=pl.BlockSpec((1, tq, gdim), q_map),
        scratch_shapes=scratch,
        compiler_params=compiler_params,
        cost_estimate=cost,
    )(*arrs)

    if not direct:
        out = out.reshape(B, n_kv_heads, S, gdim).transpose(0, 2, 1, 3)
        out = out.reshape(B, S, qsz)
    return out


# ---------------------------------------------------------------------------
# Glue (RoPE, parameter prep) in plain JAX
# ---------------------------------------------------------------------------

def make_pos_cis(seqlen, head_dim, theta=10000.0):
    """cos/sin of shape (seqlen, head_dim // 2) — real/imag parts of pos_cis."""
    freqs = 1.0 / (theta ** (jnp.arange(0, head_dim, 2, dtype=jnp.float32) / head_dim))
    t = jnp.arange(seqlen, dtype=jnp.float32)
    ang = jnp.outer(t, freqs)
    return jnp.cos(ang), jnp.sin(ang)


def apply_rot_emb(x, cos, sin):
    """x: (B, S, H, D). Interleaved-pair RoPE (view_as_complex semantics)."""
    B, S, H, D = x.shape
    xf = x.astype(jnp.float32).reshape(B, S, H, D // 2, 2)
    xe, xo = xf[..., 0], xf[..., 1]
    c = cos[None, :, None, :]
    s = sin[None, :, None, :]
    oe = xe * c - xo * s
    oo = xe * s + xo * c
    out = jnp.stack([oe, oo], axis=-1).reshape(B, S, H, D)
    return out.astype(x.dtype)


def prepare_params(params, n_heads, n_kv_heads):
    """One-time prep: fold softmax scale into wq, fuse QKV, cast weights bf16."""
    dim = params["wq"].shape[0]
    head_dim = dim // n_heads
    scale = 1.0 / math.sqrt(head_dim)
    wq_scaled = params["wq"] * scale   # exact: RoPE is linear, scale commutes
    wqkv = jnp.concatenate([wq_scaled, params["wk"], params["wv"]],
                           axis=1).astype(jnp.bfloat16)
    return {"wqkv": wqkv, "wo": params["wo"].astype(jnp.bfloat16)}


def attention_forward(x, prep, cos, sin, n_heads, n_kv_heads):
    """Full forward pass of the Attention module (eval mode, kv_cache=False)."""
    B, S, dim = x.shape
    head_dim = dim // n_heads
    q_sz = n_heads * head_dim
    kv_sz = n_kv_heads * head_dim

    # Fused QKV projection: x read from HBM once; bf16 output (re-used as bf16
    # downstream anyway), halving the write-back + re-read traffic.
    x2d = x.reshape(B * S, dim)
    qkv = pallas_matmul(x2d, prep["wqkv"], out_dtype=jnp.bfloat16)

    xq = qkv[:, :q_sz].reshape(B, S, n_heads, head_dim)
    xk = qkv[:, q_sz:q_sz + kv_sz].reshape(B, S, n_kv_heads, head_dim)
    xv = qkv[:, q_sz + kv_sz:].reshape(B, S, kv_sz)   # stays in (B,S,KVH*D)

    # TODO(synk): fuse this RoPE pass into the attention kernel (pair-swap via
    # lane roll on the resident q/k tiles) to remove one HBM round trip.
    xq = apply_rot_emb(xq, cos, sin)
    xk = apply_rot_emb(xk, cos, sin)

    q = xq.reshape(B, S, q_sz)
    k = xk.reshape(B, S, kv_sz)
    v = xv

    # GQA handled inside the kernel (no jnp.repeat, no head transposes on the
    # aligned path); output lands lane-dense in (B, S, H*D).
    out = flash_attention_gqa(q, k, v, n_heads=n_heads, n_kv_heads=n_kv_heads)

    y = pallas_matmul(out.reshape(B * S, q_sz), prep["wo"],
                      out_dtype=jnp.float32)
    # Dropout is a no-op here (eval mode / dropout_p = 0.0).
    return y.reshape(B, S, dim)


# ---------------------------------------------------------------------------
# Pure-JAX reference (same precision policy: bf16 storage, f32 accumulation)
# ---------------------------------------------------------------------------

def reference_forward(x, params, cos, sin, n_heads, n_kv_heads):
    B, S, dim = x.shape
    head_dim = dim // n_heads
    n_reps = n_heads // n_kv_heads

    def mm(a, b):
        return jnp.dot(a.astype(jnp.bfloat16), b.astype(jnp.bfloat16),
                       preferred_element_type=jnp.float32)

    x2d = x.reshape(B * S, dim)
    xq = mm(x2d, params["wq"]).astype(jnp.bfloat16).reshape(B, S, n_heads, head_dim)
    xk = mm(x2d, params["wk"]).astype(jnp.bfloat16).reshape(B, S, n_kv_heads, head_dim)
    xv = mm(x2d, params["wv"]).astype(jnp.bfloat16).reshape(B, S, n_kv_heads, head_dim)

    xq = apply_rot_emb(xq, cos, sin)
    xk = apply_rot_emb(xk, cos, sin)

    qh = jnp.transpose(xq, (0, 2, 1, 3))
    kh = jnp.repeat(jnp.transpose(xk, (0, 2, 1, 3)), n_reps, axis=1)
    vh = jnp.repeat(jnp.transpose(xv, (0, 2, 1, 3)), n_reps, axis=1)

    scale = 1.0 / math.sqrt(head_dim)
    s = jnp.einsum("bhqd,bhkd->bhqk", qh.astype(jnp.bfloat16),
                   kh.astype(jnp.bfloat16),
                   preferred_element_type=jnp.float32) * scale
    p = jax.nn.softmax(s, axis=-1)
    o = jnp.einsum("bhqk,bhkd->bhqd", p.astype(jnp.bfloat16),
                   vh.astype(jnp.bfloat16),
                   preferred_element_type=jnp.float32)
    o = jnp.transpose(o, (0, 2, 1, 3)).reshape(B * S, n_heads * head_dim)
    return mm(o, params["wo"]).reshape(B, S, dim)


# ---------------------------------------------------------------------------
# Main
# ---------------------------------------------------------------------------

if __name__ == "__main__":
    # Small config consistent with the module: dim=32, n_heads=4, n_kv_heads=2.
    B, S, dim = 2, 8, 32
    n_heads, n_kv_heads = 4, 2
    head_dim = dim // n_heads

    key = jax.random.PRNGKey(0)
    kx, kq, kk, kv_, ko = jax.random.split(key, 5)

    x = jax.random.normal(kx, (B, S, dim), dtype=jnp.float32)

    # Weights stored as (in_features, out_features) == W.T of nn.Linear weights.
    w_init = 1.0 / math.sqrt(dim)
    params = {
        "wq": jax.random.normal(kq, (dim, n_heads * head_dim), jnp.float32) * w_init,
        "wk": jax.random.normal(kk, (dim, n_kv_heads * head_dim), jnp.float32) * w_init,
        "wv": jax.random.normal(kv_, (dim, n_kv_heads * head_dim), jnp.float32) * w_init,
        "wo": jax.random.normal(ko, (n_heads * head_dim, dim), jnp.float32) * w_init,
    }

    cos, sin = make_pos_cis(S, head_dim)
    prep = prepare_params(params, n_heads, n_kv_heads)

    fwd = jax.jit(attention_forward, static_argnums=(4, 5))
    out = fwd(x, prep, cos, sin, n_heads, n_kv_heads)
    out = jax.block_until_ready(out)

    ref = reference_forward(x, params, cos, sin, n_heads, n_kv_heads)
    assert out.shape == (B, S, dim)
    assert jnp.allclose(out, ref, atol=2e-2, rtol=2e-2), (
        f"mismatch vs reference: max abs diff = {jnp.max(jnp.abs(out - ref))}")

    print("KERNEL_OK")
</pallas_src>

<mosaic_0001>
module attributes {stable_mosaic.version = 11 : i64} {
  func.func @_matmul_kernel(%arg0: i32, %arg1: i32, %arg2: i32, %arg3: memref<16x32xf32, #tpu.memory_space<vmem>>, %arg4: memref<32x64xbf16, #tpu.memory_space<vmem>>, %arg5: memref<16x64xbf16, #tpu.memory_space<vmem>>, %arg6: memref<16x64xf32, #tpu.memory_space<vmem>>) attributes {dimension_semantics = [#tpu.dimension_semantics<parallel>, #tpu.dimension_semantics<parallel>, #tpu.dimension_semantics<arbitrary>], iteration_bounds = array<i64: 1, 1, 1>, scalar_prefetch = 0 : i64, scratch_operands = 1 : i64, tpu.core_type = #tpu.core_type<tc>, window_params = [{transform_indices = @transform_0, window_bounds = array<i64: 16, 32>}, {transform_indices = @transform_1, window_bounds = array<i64: 32, 64>}, {transform_indices = @transform_2, window_bounds = array<i64: 16, 64>}]} {
    %c0_i32 = arith.constant 0 : i32
    %0 = arith.cmpi eq, %arg2, %c0_i32 : i32
    %1 = arith.extui %0 : i1 to i32
    %c0_i32_0 = arith.constant 0 : i32
    %2 = arith.cmpi ne, %1, %c0_i32_0 : i32
    scf.if %2 {
      %cst_10 = arith.constant 0.000000e+00 : f32
      %13 = vector.broadcast %cst_10 : f32 to vector<16x64xf32>
      %c0_11 = arith.constant 0 : index
      %c0_12 = arith.constant 0 : index
      %14 = vector.load %arg6[%c0_11, %c0_12] : memref<16x64xf32, #tpu.memory_space<vmem>>, vector<16x64xf32>
      tpu.vector_store %arg6[%c0_11, %c0_12], %13 {strides = array<i32>} : memref<16x64xf32, #tpu.memory_space<vmem>>, vector<16x64xf32>,
    } else {
    }
    %c0 = arith.constant 0 : index
    %c0_1 = arith.constant 0 : index
    %3 = vector.load %arg6[%c0, %c0_1] : memref<16x64xf32, #tpu.memory_space<vmem>>, vector<16x64xf32>
    %c0_2 = arith.constant 0 : index
    %c0_3 = arith.constant 0 : index
    %4 = vector.load %arg3[%c0_2, %c0_3] : memref<16x32xf32, #tpu.memory_space<vmem>>, vector<16x32xf32>
    %5 = arith.truncf %4 : vector<16x32xf32> to vector<16x32xbf16>
    %c0_4 = arith.constant 0 : index
    %c0_5 = arith.constant 0 : index
    %6 = vector.load %arg4[%c0_4, %c0_5] : memref<32x64xbf16, #tpu.memory_space<vmem>>, vector<32x64xbf16>
    %cst = arith.constant dense<0.000000e+00> : vector<16x64xf32>
    %7 = tpu.matmul %5, %6, %cst {dimension_numbers = #tpu.dot_dimension_numbers<[1], [0], [0], [1], [0, 0, 1, 1], [], []>} : vector<16x32xbf16>, vector<32x64xbf16>, vector<16x64xf32> -> vector<16x64xf32>
    %8 = arith.addf %3, %7 : vector<16x64xf32>
    %c0_6 = arith.constant 0 : index
    %c0_7 = arith.constant 0 : index
    %9 = vector.load %arg6[%c0_6, %c0_7] : memref<16x64xf32, #tpu.memory_space<vmem>>, vector<16x64xf32>
    tpu.vector_store %arg6[%c0_6, %c0_7], %8 {strides = array<i32>} : memref<16x64xf32, #tpu.memory_space<vmem>>, vector<16x64xf32>,
    %c0_i32_8 = arith.constant 0 : i32
    %10 = arith.cmpi eq, %arg2, %c0_i32_8 : i32
    %11 = arith.extui %10 : i1 to i32
    %c0_i32_9 = arith.constant 0 : i32
    %12 = arith.cmpi ne, %11, %c0_i32_9 : i32
    scf.if %12 {
      %c0_10 = arith.constant 0 : index
      %c0_11 = arith.constant 0 : index
      %13 = vector.load %arg6[%c0_10, %c0_11] : memref<16x64xf32, #tpu.memory_space<vmem>>, vector<16x64xf32>
      %14 = arith.truncf %13 : vector<16x64xf32> to vector<16x64xbf16>
      %c0_12 = arith.constant 0 : index
      %c0_13 = arith.constant 0 : index
      %15 = vector.load %arg5[%c0_12, %c0_13] : memref<16x64xbf16, #tpu.memory_space<vmem>>, vector<16x64xbf16>
      tpu.vector_store %arg5[%c0_12, %c0_13], %14 {strides = array<i32>} : memref<16x64xbf16, #tpu.memory_space<vmem>>, vector<16x64xbf16>,
    } else {
    }
    return
  }
  func.func @transform_0(%arg0: i32, %arg1: i32, %arg2: i32) -> (i32, i32) {
    %c0_i32 = arith.constant 0 : i32
    return %arg0, %arg2 : i32, i32
  }
  func.func @transform_1(%arg0: i32, %arg1: i32, %arg2: i32) -> (i32, i32) {
    %c0_i32 = arith.constant 0 : i32
    return %arg2, %arg1 : i32, i32
  }
  func.func @transform_2(%arg0: i32, %arg1: i32, %arg2: i32) -> (i32, i32) {
    %c0_i32 = arith.constant 0 : i32
    return %arg0, %arg1 : i32, i32
  }
}

module attributes {stable_mosaic.version = 11 : i64} {
  func.func @_flash_kernel(%arg0: i32, %arg1: i32, %arg2: i32, %arg3: memref<1x8x16xbf16, #tpu.memory_space<vmem>>, %arg4: memref<1x8x8xbf16, #tpu.memory_space<vmem>>, %arg5: memref<1x8x8xbf16, #tpu.memory_space<vmem>>, %arg6: memref<1x8x16xbf16, #tpu.memory_space<vmem>>, %arg7: memref<2x8x1xf32, #tpu.memory_space<vmem>>, %arg8: memref<2x8x1xf32, #tpu.memory_space<vmem>>, %arg9: memref<2x8x8xf32, #tpu.memory_space<vmem>>) attributes {dimension_semantics = [#tpu.dimension_semantics<parallel>, #tpu.dimension_semantics<parallel>, #tpu.dimension_semantics<arbitrary>], iteration_bounds = array<i64: 4, 1, 1>, scalar_prefetch = 0 : i64, scratch_operands = 3 : i64, tpu.core_type = #tpu.core_type<tc>, window_params = [{transform_indices = @transform_0, window_bounds = array<i64: 1, 8, 16>}, {transform_indices = @transform_1, window_bounds = array<i64: 1, 8, 8>}, {transform_indices = @transform_2, window_bounds = array<i64: 1, 8, 8>}, {transform_indices = @transform_3, window_bounds = array<i64: 1, 8, 16>}]} {
    %c0_i32 = arith.constant 0 : i32
    %0 = arith.cmpi eq, %arg2, %c0_i32 : i32
    %1 = arith.extui %0 : i1 to i32
    %c0_i32_0 = arith.constant 0 : i32
    %2 = arith.cmpi ne, %1, %c0_i32_0 : i32
    scf.if %2 {
      %cst_55 = arith.constant 0xFF800000 : f32
      %80 = vector.broadcast %cst_55 : f32 to vector<2x8x1xf32>
      %c0_56 = arith.constant 0 : index
      %c0_57 = arith.constant 0 : index
      %c0_58 = arith.constant 0 : index
      %81 = vector.load %arg7[%c0_56, %c0_57, %c0_58] : memref<2x8x1xf32, #tpu.memory_space<vmem>>, vector<2x8x1xf32>
      tpu.vector_store %arg7[%c0_56, %c0_57, %c0_58], %80 {strides = array<i32>} : memref<2x8x1xf32, #tpu.memory_space<vmem>>, vector<2x8x1xf32>,
      %cst_59 = arith.constant 0.000000e+00 : f32
      %82 = vector.broadcast %cst_59 : f32 to vector<2x8x1xf32>
      %c0_60 = arith.constant 0 : index
      %c0_61 = arith.constant 0 : index
      %c0_62 = arith.constant 0 : index
      %83 = vector.load %arg8[%c0_60, %c0_61, %c0_62] : memref<2x8x1xf32, #tpu.memory_space<vmem>>, vector<2x8x1xf32>
      tpu.vector_store %arg8[%c0_60, %c0_61, %c0_62], %82 {strides = array<i32>} : memref<2x8x1xf32, #tpu.memory_space<vmem>>, vector<2x8x1xf32>,
      %cst_63 = arith.constant 0.000000e+00 : f32
      %84 = vector.broadcast %cst_63 : f32 to vector<2x8x8xf32>
      %c0_64 = arith.constant 0 : index
      %c0_65 = arith.constant 0 : index
      %c0_66 = arith.constant 0 : index
      %85 = vector.load %arg9[%c0_64, %c0_65, %c0_66] : memref<2x8x8xf32, #tpu.memory_space<vmem>>, vector<2x8x8xf32>
      tpu.vector_store %arg9[%c0_64, %c0_65, %c0_66], %84 {strides = array<i32>} : memref<2x8x8xf32, #tpu.memory_space<vmem>>, vector<2x8x8xf32>,
    } else {
    }
    %c0 = arith.constant 0 : index
    %c0_1 = arith.constant 0 : index
    %c0_2 = arith.constant 0 : index
    %3 = vector.load %arg4[%c0, %c0_1, %c0_2] : memref<1x8x8xbf16, #tpu.memory_space<vmem>>, vector<1x8x8xbf16>
    %4 = vector.shape_cast %3 : vector<1x8x8xbf16> to vector<8x8xbf16>
    %c0_3 = arith.constant 0 : index
    %c0_4 = arith.constant 0 : index
    %c0_5 = arith.constant 0 : index
    %5 = vector.load %arg5[%c0_3, %c0_4, %c0_5] : memref<1x8x8xbf16, #tpu.memory_space<vmem>>, vector<1x8x8xbf16>
    %6 = vector.shape_cast %5 : vector<1x8x8xbf16> to vector<8x8xbf16>
    %c0_6 = arith.constant 0 : index
    %c0_7 = arith.constant 0 : index
    %c0_8 = arith.constant 0 : index
    %7 = vector.load %arg3[%c0_6, %c0_7, %c0_8] : memref<1x8x16xbf16, #tpu.memory_space<vmem>>, vector<1x8x8xbf16>
    %8 = vector.shape_cast %7 : vector<1x8x8xbf16> to vector<8x8xbf16>
    %cst = arith.constant dense<0.000000e+00> : vector<8x8xf32>
    %9 = tpu.matmul %8, %4, %cst {dimension_numbers = #tpu.dot_dimension_numbers<[1], [1], [0], [0], [0, 0, 1, 0], [], []>} : vector<8x8xbf16>, vector<8x8xbf16>, vector<8x8xf32> -> vector<8x8xf32>
    %c0_9 = arith.constant 0 : index
    %c0_10 = arith.constant 0 : index
    %c0_11 = arith.constant 0 : index
    %10 = vector.load %arg7[%c0_9, %c0_10, %c0_11] : memref<2x8x1xf32, #tpu.memory_space<vmem>>, vector<1x8x1xf32>
    %11 = vector.shape_cast %10 : vector<1x8x1xf32> to vector<8x1xf32>
    %cst_12 = arith.constant dense<0xFF800000> : vector<8xf32>
    %12 = vector.multi_reduction <maximumf>, %9, %cst_12 [1] : vector<8x8xf32> to vector<8xf32>
    %13 = vector.shape_cast %12 : vector<8xf32> to vector<8x1xf32>
    %14 = arith.maximumf %11, %13 : vector<8x1xf32>
    %15 = arith.subf %11, %14 : vector<8x1xf32>
    %16 = math.exp %15 : vector<8x1xf32>
    %17 = vector.broadcast %14 : vector<8x1xf32> to vector<8x8xf32>
    %18 = arith.subf %9, %17 : vector<8x8xf32>
    %19 = math.exp %18 : vector<8x8xf32>
    %c0_13 = arith.constant 0 : index
    %c0_14 = arith.constant 0 : index
    %c0_15 = arith.constant 0 : index
    %20 = vector.load %arg8[%c0_13, %c0_14, %c0_15] : memref<2x8x1xf32, #tpu.memory_space<vmem>>, vector<1x8x1xf32>
    %21 = vector.shape_cast %20 : vector<1x8x1xf32> to vector<8x1xf32>
    %22 = arith.mulf %16, %21 : vector<8x1xf32>
    %cst_16 = arith.constant dense<0.000000e+00> : vector<8xf32>
    %23 = vector.multi_reduction <add>, %19, %cst_16 [1] : vector<8x8xf32> to vector<8xf32>
    %24 = vector.shape_cast %23 : vector<8xf32> to vector<8x1xf32>
    %25 = arith.addf %22, %24 : vector<8x1xf32>
    %c0_17 = arith.constant 0 : index
    %c0_18 = arith.constant 0 : index
    %c0_19 = arith.constant 0 : index
    %26 = vector.load %arg8[%c0_17, %c0_18, %c0_19] : memref<2x8x1xf32, #tpu.memory_space<vmem>>, vector<1x8x1xf32>
    %27 = vector.shape_cast %26 : vector<1x8x1xf32> to vector<8x1xf32>
    %28 = vector.shape_cast %25 : vector<8x1xf32> to vector<1x8x1xf32>
    tpu.vector_store %arg8[%c0_17, %c0_18, %c0_19], %28 {strides = array<i32>} : memref<2x8x1xf32, #tpu.memory_space<vmem>>, vector<1x8x1xf32>,
    %c0_20 = arith.constant 0 : index
    %c0_21 = arith.constant 0 : index
    %c0_22 = arith.constant 0 : index
    %29 = vector.load %arg9[%c0_20, %c0_21, %c0_22] : memref<2x8x8xf32, #tpu.memory_space<vmem>>, vector<1x8x8xf32>
    %30 = vector.shape_cast %29 : vector<1x8x8xf32> to vector<8x8xf32>
    %31 = vector.broadcast %16 : vector<8x1xf32> to vector<8x8xf32>
    %32 = arith.mulf %31, %30 : vector<8x8xf32>
    %33 = arith.truncf %19 : vector<8x8xf32> to vector<8x8xbf16>
    %cst_23 = arith.constant dense<0.000000e+00> : vector<8x8xf32>
    %34 = tpu.matmul %33, %6, %cst_23 {dimension_numbers = #tpu.dot_dimension_numbers<[1], [0], [0], [1], [0, 0, 1, 1], [], []>} : vector<8x8xbf16>, vector<8x8xbf16>, vector<8x8xf32> -> vector<8x8xf32>
    %35 = arith.addf %32, %34 : vector<8x8xf32>
    %c0_24 = arith.constant 0 : index
    %c0_25 = arith.constant 0 : index
    %c0_26 = arith.constant 0 : index
    %36 = vector.load %arg9[%c0_24, %c0_25, %c0_26] : memref<2x8x8xf32, #tpu.memory_space<vmem>>, vector<1x8x8xf32>
    %37 = vector.shape_cast %36 : vector<1x8x8xf32> to vector<8x8xf32>
    %38 = vector.shape_cast %35 : vector<8x8xf32> to vector<1x8x8xf32>
    tpu.vector_store %arg9[%c0_24, %c0_25, %c0_26], %38 {strides = array<i32>} : memref<2x8x8xf32, #tpu.memory_space<vmem>>, vector<1x8x8xf32>,
    %c0_27 = arith.constant 0 : index
    %c0_28 = arith.constant 0 : index
    %c0_29 = arith.constant 0 : index
    %39 = vector.load %arg7[%c0_27, %c0_28, %c0_29] : memref<2x8x1xf32, #tpu.memory_space<vmem>>, vector<1x8x1xf32>
    %40 = vector.shape_cast %39 : vector<1x8x1xf32> to vector<8x1xf32>
    %41 = vector.shape_cast %14 : vector<8x1xf32> to vector<1x8x1xf32>
    tpu.vector_store %arg7[%c0_27, %c0_28, %c0_29], %41 {strides = array<i32>} : memref<2x8x1xf32, #tpu.memory_space<vmem>>, vector<1x8x1xf32>,
    %c0_30 = arith.constant 0 : index
    %c0_31 = arith.constant 0 : index
    %c8 = arith.constant 8 : index
    %42 = vector.load %arg3[%c0_30, %c0_31, %c8] : memref<1x8x16xbf16, #tpu.memory_space<vmem>>, vector<1x8x8xbf16>
    %43 = vector.shape_cast %42 : vector<1x8x8xbf16> to vector<8x8xbf16>
    %cst_32 = arith.constant dense<0.000000e+00> : vector<8x8xf32>
    %44 = tpu.matmul %43, %4, %cst_32 {dimension_numbers = #tpu.dot_dimension_numbers<[1], [1], [0], [0], [0, 0, 1, 0], [], []>} : vector<8x8xbf16>, vector<8x8xbf16>, vector<8x8xf32> -> vector<8x8xf32>
    %c1 = arith.constant 1 : index
    %c0_33 = arith.constant 0 : index
    %c0_34 = arith.constant 0 : index
    %45 = vector.load %arg7[%c1, %c0_33, %c0_34] : memref<2x8x1xf32, #tpu.memory_space<vmem>>, vector<1x8x1xf32>
    %46 = vector.shape_cast %45 : vector<1x8x1xf32> to vector<8x1xf32>
    %cst_35 = arith.constant dense<0xFF800000> : vector<8xf32>
    %47 = vector.multi_reduction <maximumf>, %44, %cst_35 [1] : vector<8x8xf32> to vector<8xf32>
    %48 = vector.shape_cast %47 : vector<8xf32> to vector<8x1xf32>
    %49 = arith.maximumf %46, %48 : vector<8x1xf32>
    %50 = arith.subf %46, %49 : vector<8x1xf32>
    %51 = math.exp %50 : vector<8x1xf32>
    %52 = vector.broadcast %49 : vector<8x1xf32> to vector<8x8xf32>
    %53 = arith.subf %44, %52 : vector<8x8xf32>
    %54 = math.exp %53 : vector<8x8xf32>
    %c1_36 = arith.constant 1 : index
    %c0_37 = arith.constant 0 : index
    %c0_38 = arith.constant 0 : index
    %55 = vector.load %arg8[%c1_36, %c0_37, %c0_38] : memref<2x8x1xf32, #tpu.memory_space<vmem>>, vector<1x8x1xf32>
    %56 = vector.shape_cast %55 : vector<1x8x1xf32> to vector<8x1xf32>
    %57 = arith.mulf %51, %56 : vector<8x1xf32>
    %cst_39 = arith.constant dense<0.000000e+00> : vector<8xf32>
    %58 = vector.multi_reduction <add>, %54, %cst_39 [1] : vector<8x8xf32> to vector<8xf32>
    %59 = vector.shape_cast %58 : vector<8xf32> to vector<8x1xf32>
    %60 = arith.addf %57, %59 : vector<8x1xf32>
    %c1_40 = arith.constant 1 : index
    %c0_41 = arith.constant 0 : index
    %c0_42 = arith.constant 0 : index
    %61 = vector.load %arg8[%c1_40, %c0_41, %c0_42] : memref<2x8x1xf32, #tpu.memory_space<vmem>>, vector<1x8x1xf32>
    %62 = vector.shape_cast %61 : vector<1x8x1xf32> to vector<8x1xf32>
    %63 = vector.shape_cast %60 : vector<8x1xf32> to vector<1x8x1xf32>
    tpu.vector_store %arg8[%c1_40, %c0_41, %c0_42], %63 {strides = array<i32>} : memref<2x8x1xf32, #tpu.memory_space<vmem>>, vector<1x8x1xf32>,
    %c1_43 = arith.constant 1 : index
    %c0_44 = arith.constant 0 : index
    %c0_45 = arith.constant 0 : index
    %64 = vector.load %arg9[%c1_43, %c0_44, %c0_45] : memref<2x8x8xf32, #tpu.memory_space<vmem>>, vector<1x8x8xf32>
    %65 = vector.shape_cast %64 : vector<1x8x8xf32> to vector<8x8xf32>
    %66 = vector.broadcast %51 : vector<8x1xf32> to vector<8x8xf32>
    %67 = arith.mulf %66, %65 : vector<8x8xf32>
    %68 = arith.truncf %54 : vector<8x8xf32> to vector<8x8xbf16>
    %cst_46 = arith.constant dense<0.000000e+00> : vector<8x8xf32>
    %69 = tpu.matmul %68, %6, %cst_46 {dimension_numbers = #tpu.dot_dimension_numbers<[1], [0], [0], [1], [0, 0, 1, 1], [], []>} : vector<8x8xbf16>, vector<8x8xbf16>, vector<8x8xf32> -> vector<8x8xf32>
    %70 = arith.addf %67, %69 : vector<8x8xf32>
    %c1_47 = arith.constant 1 : index
    %c0_48 = arith.constant 0 : index
    %c0_49 = arith.constant 0 : index
    %71 = vector.load %arg9[%c1_47, %c0_48, %c0_49] : memref<2x8x8xf32, #tpu.memory_space<vmem>>, vector<1x8x8xf32>
    %72 = vector.shape_cast %71 : vector<1x8x8xf32> to vector<8x8xf32>
    %73 = vector.shape_cast %70 : vector<8x8xf32> to vector<1x8x8xf32>
    tpu.vector_store %arg9[%c1_47, %c0_48, %c0_49], %73 {strides = array<i32>} : memref<2x8x8xf32, #tpu.memory_space<vmem>>, vector<1x8x8xf32>,
    %c1_50 = arith.constant 1 : index
    %c0_51 = arith.constant 0 : index
    %c0_52 = arith.constant 0 : index
    %74 = vector.load %arg7[%c1_50, %c0_51, %c0_52] : memref<2x8x1xf32, #tpu.memory_space<vmem>>, vector<1x8x1xf32>
    %75 = vector.shape_cast %74 : vector<1x8x1xf32> to vector<8x1xf32>
    %76 = vector.shape_cast %49 : vector<8x1xf32> to vector<1x8x1xf32>
    tpu.vector_store %arg7[%c1_50, %c0_51, %c0_52], %76 {strides = array<i32>} : memref<2x8x1xf32, #tpu.memory_space<vmem>>, vector<1x8x1xf32>,
    %c0_i32_53 = arith.constant 0 : i32
    %77 = arith.cmpi eq, %arg2, %c0_i32_53 : i32
    %78 = arith.extui %77 : i1 to i32
    %c0_i32_54 = arith.constant 0 : i32
    %79 = arith.cmpi ne, %78, %c0_i32_54 : i32
    scf.if %79 {
      %c0_55 = arith.constant 0 : index
      %c0_56 = arith.constant 0 : index
      %c0_57 = arith.constant 0 : index
      %80 = vector.load %arg8[%c0_55, %c0_56, %c0_57] : memref<2x8x1xf32, #tpu.memory_space<vmem>>, vector<1x8x1xf32>
      %81 = vector.shape_cast %80 : vector<1x8x1xf32> to vector<8x1xf32>
      %82 = tpu.reciprocal %81 : vector<8x1xf32> -> vector<8x1xf32>
      %c0_58 = arith.constant 0 : index
      %c0_59 = arith.constant 0 : index
      %c0_60 = arith.constant 0 : index
      %83 = vector.load %arg9[%c0_58, %c0_59, %c0_60] : memref<2x8x8xf32, #tpu.memory_space<vmem>>, vector<1x8x8xf32>
      %84 = vector.shape_cast %83 : vector<1x8x8xf32> to vector<8x8xf32>
      %85 = vector.broadcast %82 : vector<8x1xf32> to vector<8x8xf32>
      %86 = arith.mulf %84, %85 : vector<8x8xf32>
      %87 = arith.truncf %86 : vector<8x8xf32> to vector<8x8xbf16>
      %c0_61 = arith.constant 0 : index
      %c0_62 = arith.constant 0 : index
      %c0_63 = arith.constant 0 : index
      %88 = vector.load %arg6[%c0_61, %c0_62, %c0_63] : memref<1x8x16xbf16, #tpu.memory_space<vmem>>, vector<1x8x8xbf16>
      %89 = vector.shape_cast %88 : vector<1x8x8xbf16> to vector<8x8xbf16>
      %90 = vector.shape_cast %87 : vector<8x8xbf16> to vector<1x8x8xbf16>
      tpu.vector_store %arg6[%c0_61, %c0_62, %c0_63], %90 {strides = array<i32>} : memref<1x8x16xbf16, #tpu.memory_space<vmem>>, vector<1x8x8xbf16>,
      %c1_64 = arith.constant 1 : index
      %c0_65 = arith.constant 0 : index
      %c0_66 = arith.constant 0 : index
      %91 = vector.load %arg8[%c1_64, %c0_65, %c0_66] : memref<2x8x1xf32, #tpu.memory_space<vmem>>, vector<1x8x1xf32>
      %92 = vector.shape_cast %91 : vector<1x8x1xf32> to vector<8x1xf32>
      %93 = tpu.reciprocal %92 : vector<8x1xf32> -> vector<8x1xf32>
      %c1_67 = arith.constant 1 : index
      %c0_68 = arith.constant 0 : index
      %c0_69 = arith.constant 0 : index
      %94 = vector.load %arg9[%c1_67, %c0_68, %c0_69] : memref<2x8x8xf32, #tpu.memory_space<vmem>>, vector<1x8x8xf32>
      %95 = vector.shape_cast %94 : vector<1x8x8xf32> to vector<8x8xf32>
      %96 = vector.broadcast %93 : vector<8x1xf32> to vector<8x8xf32>
      %97 = arith.mulf %95, %96 : vector<8x8xf32>
      %98 = arith.truncf %97 : vector<8x8xf32> to vector<8x8xbf16>
      %c0_70 = arith.constant 0 : index
      %c0_71 = arith.constant 0 : index
      %c8_72 = arith.constant 8 : index
      %99 = vector.load %arg6[%c0_70, %c0_71, %c8_72] : memref<1x8x16xbf16, #tpu.memory_space<vmem>>, vector<1x8x8xbf16>
      %100 = vector.shape_cast %99 : vector<1x8x8xbf16> to vector<8x8xbf16>
      %101 = vector.shape_cast %98 : vector<8x8xbf16> to vector<1x8x8xbf16>
      tpu.vector_store %arg6[%c0_70, %c0_71, %c8_72], %101 {strides = array<i32>} : memref<1x8x16xbf16, #tpu.memory_space<vmem>>, vector<1x8x8xbf16>,
    } else {
    }
    return
  }
  func.func @transform_0(%arg0: i32, %arg1: i32, %arg2: i32) -> (i32, i32, i32) {
    %c0_i32 = arith.constant 0 : i32
    %c0_i32_0 = arith.constant 0 : i32
    return %arg0, %arg1, %c0_i32 : i32, i32, i32
  }
  func.func @transform_1(%arg0: i32, %arg1: i32, %arg2: i32) -> (i32, i32, i32) {
    %c0_i32 = arith.constant 0 : i32
    %c0_i32_0 = arith.constant 0 : i32
    return %arg0, %arg2, %c0_i32 : i32, i32, i32
  }
  func.func @transform_2(%arg0: i32, %arg1: i32, %arg2: i32) -> (i32, i32, i32) {
    %c0_i32 = arith.constant 0 : i32
    %c0_i32_0 = arith.constant 0 : i32
    return %arg0, %arg2, %c0_i32 : i32, i32, i32
  }
  func.func @transform_3(%arg0: i32, %arg1: i32, %arg2: i32) -> (i32, i32, i32) {
    %c0_i32 = arith.constant 0 : i32
    %c0_i32_0 = arith.constant 0 : i32
    return %arg0, %arg1, %c0_i32 : i32, i32, i32
  }
}

module attributes {stable_mosaic.version = 11 : i64} {
  func.func @_matmul_kernel(%arg0: i32, %arg1: i32, %arg2: i32, %arg3: memref<16x32xbf16, #tpu.memory_space<vmem>>, %arg4: memref<32x32xbf16, #tpu.memory_space<vmem>>, %arg5: memref<16x32xf32, #tpu.memory_space<vmem>>, %arg6: memref<16x32xf32, #tpu.memory_space<vmem>>) attributes {dimension_semantics = [#tpu.dimension_semantics<parallel>, #tpu.dimension_semantics<parallel>, #tpu.dimension_semantics<arbitrary>], iteration_bounds = array<i64: 1, 1, 1>, scalar_prefetch = 0 : i64, scratch_operands = 1 : i64, tpu.core_type = #tpu.core_type<tc>, window_params = [{transform_indices = @transform_0, window_bounds = array<i64: 16, 32>}, {transform_indices = @transform_1, window_bounds = array<i64: 32, 32>}, {transform_indices = @transform_2, window_bounds = array<i64: 16, 32>}]} {
    %c0_i32 = arith.constant 0 : i32
    %0 = arith.cmpi eq, %arg2, %c0_i32 : i32
    %1 = arith.extui %0 : i1 to i32
    %c0_i32_0 = arith.constant 0 : i32
    %2 = arith.cmpi ne, %1, %c0_i32_0 : i32
    scf.if %2 {
      %cst_10 = arith.constant 0.000000e+00 : f32
      %12 = vector.broadcast %cst_10 : f32 to vector<16x32xf32>
      %c0_11 = arith.constant 0 : index
      %c0_12 = arith.constant 0 : index
      %13 = vector.load %arg6[%c0_11, %c0_12] : memref<16x32xf32, #tpu.memory_space<vmem>>, vector<16x32xf32>
      tpu.vector_store %arg6[%c0_11, %c0_12], %12 {strides = array<i32>} : memref<16x32xf32, #tpu.memory_space<vmem>>, vector<16x32xf32>,
    } else {
    }
    %c0 = arith.constant 0 : index
    %c0_1 = arith.constant 0 : index
    %3 = vector.load %arg6[%c0, %c0_1] : memref<16x32xf32, #tpu.memory_space<vmem>>, vector<16x32xf32>
    %c0_2 = arith.constant 0 : index
    %c0_3 = arith.constant 0 : index
    %4 = vector.load %arg3[%c0_2, %c0_3] : memref<16x32xbf16, #tpu.memory_space<vmem>>, vector<16x32xbf16>
    %c0_4 = arith.constant 0 : index
    %c0_5 = arith.constant 0 : index
    %5 = vector.load %arg4[%c0_4, %c0_5] : memref<32x32xbf16, #tpu.memory_space<vmem>>, vector<32x32xbf16>
    %cst = arith.constant dense<0.000000e+00> : vector<16x32xf32>
    %6 = tpu.matmul %4, %5, %cst {dimension_numbers = #tpu.dot_dimension_numbers<[1], [0], [0], [1], [0, 0, 1, 1], [], []>} : vector<16x32xbf16>, vector<32x32xbf16>, vector<16x32xf32> -> vector<16x32xf32>
    %7 = arith.addf %3, %6 : vector<16x32xf32>
    %c0_6 = arith.constant 0 : index
    %c0_7 = arith.constant 0 : index
    %8 = vector.load %arg6[%c0_6, %c0_7] : memref<16x32xf32, #tpu.memory_space<vmem>>, vector<16x32xf32>
    tpu.vector_store %arg6[%c0_6, %c0_7], %7 {strides = array<i32>} : memref<16x32xf32, #tpu.memory_space<vmem>>, vector<16x32xf32>,
    %c0_i32_8 = arith.constant 0 : i32
    %9 = arith.cmpi eq, %arg2, %c0_i32_8 : i32
    %10 = arith.extui %9 : i1 to i32
    %c0_i32_9 = arith.constant 0 : i32
    %11 = arith.cmpi ne, %10, %c0_i32_9 : i32
    scf.if %11 {
      %c0_10 = arith.constant 0 : index
      %c0_11 = arith.constant 0 : index
      %12 = vector.load %arg6[%c0_10, %c0_11] : memref<16x32xf32, #tpu.memory_space<vmem>>, vector<16x32xf32>
      %c0_12 = arith.constant 0 : index
      %c0_13 = arith.constant 0 : index
      %13 = vector.load %arg5[%c0_12, %c0_13] : memref<16x32xf32, #tpu.memory_space<vmem>>, vector<16x32xf32>
      tpu.vector_store %arg5[%c0_12, %c0_13], %12 {strides = array<i32>} : memref<16x32xf32, #tpu.memory_space<vmem>>, vector<16x32xf32>,
    } else {
    }
    return
  }
  func.func @transform_0(%arg0: i32, %arg1: i32, %arg2: i32) -> (i32, i32) {
    %c0_i32 = arith.constant 0 : i32
    return %arg0, %arg2 : i32, i32
  }
  func.func @transform_1(%arg0: i32, %arg1: i32, %arg2: i32) -> (i32, i32) {
    %c0_i32 = arith.constant 0 : i32
    return %arg2, %arg1 : i32, i32
  }
  func.func @transform_2(%arg0: i32, %arg1: i32, %arg2: i32) -> (i32, i32) {
    %c0_i32 = arith.constant 0 : i32
    return %arg0, %arg1 : i32, i32
  }
}

</mosaic_0001>

<llo_original>
// kernel: attention_forward.3
$region0: #{attention_forward.3}
  #allocation0 [shape = 'u32[]', space=smem, size = 0x4, offset = 0x4, fixed_abs, tag = 'smem constant byte address 0x4 - core index']
  #allocation1 [shape = 'u32[144,128]{1,0:T(1,128)}', space=vmem, size = 0x12000, scoped, tag = 'internal scratch']
  #allocation2 [shape = 'f32[16,64]{1,0:T(8,128)}', space=vmem, size = 0x2000, scoped, tag = 'scratch operand']
  %s0 = inlined_call_operand.hbm [shape: f32[16,32], index: 0, kind: input, shape index: {}]
  %s1 = inlined_call_operand.hbm [shape: bf16[32,64], index: 1, kind: input, shape index: {}]
  %s2 = inlined_call_operand.vmem [shape: bf16[16,64], index: 2, kind: output, shape index: {}]
  %s3 = sld [smem:[#allocation0]]
  $region34: #{attention_forward.3} parent=0
    _
  %s5 = ssub.s32 1, %s3
  %s6 = scalar_select 0, %s5, %s3
  $region1: #{attention_forward.3} parent=0
    #allocation3 [shape = 'u8[8192]{0}', space=vmem, size = 0x2000, scoped, tag = 'input window, operand 0, single buffered']
    #allocation4 [shape = 's32[1]{0}', space=sflag, size = 0x4, scoped, tag = 'scoped memory for attention_forward.3']
    #allocation5 [shape = 'u8[8192]{0}', space=vmem, size = 0x2000, scoped, tag = 'input window, operand 1, single buffered']
    #allocation6 [shape = 's32[1]{0}', space=sflag, size = 0x4, scoped, tag = 'scoped memory for attention_forward.3']
    %7 = vsyncpa [#allocation4], 0
    %8 = vsyncpa [#allocation6], 0
    // Predicated region
    $region2: #{attention_forward.3} parent=1 // pred_check
      _
    $region3: #{attention_forward.3} parent=1 // pred_check_branch
      %10 = sbr.rel (0) target = $region5
    $region4: #{attention_forward.3} parent=1 // pred_region
      %s12 = ssub.s32 256, 256
      %13 = vsyncadd [#allocation4], %s12
      %s14 = sshll.u32 [#allocation3], 4
      %s15 = int_to_ptr.vmem [resolvable:$true] %s14
      %20 = dma.hbm_to_vmem [thread:$0]  %s0, 256, %s15, [#allocation4], 128, 128, 8
    $region5: #{attention_forward.3} parent=1 // pred_fallthru
      _
    // Predicated region
    $region6: #{attention_forward.3} parent=1 // pred_check
      _
    $region7: #{attention_forward.3} parent=1 // pred_check_branch
      %22 = sbr.rel (0) target = $region9
    $region8: #{attention_forward.3} parent=1 // pred_region
      %s24 = ssub.s32 256, 256
      %25 = vsyncadd [#allocation6], %s24
      %s26 = sshll.u32 [#allocation5], 4
      %s27 = int_to_ptr.vmem [resolvable:$true] %s26
      %32 = dma.hbm_to_vmem [thread:$0]  %s1, 256, %s27, [#allocation6], 64, 64, 4
    $region9: #{attention_forward.3} parent=1 // pred_fallthru
      _
    // Predicated region
    $region10: #{attention_forward.3} parent=1 // pred_check
      _
    $region11: #{attention_forward.3} parent=1 // pred_check_branch
      %34 = sbr.rel (0) target = $region13
    $region12: #{attention_forward.3} parent=1 // pred_region
      %35 = dma.done [#allocation4], 256
    $region13: #{attention_forward.3} parent=1 // pred_fallthru
      _
    // Predicated region
    $region14: #{attention_forward.3} parent=1 // pred_check
      _
    $region15: #{attention_forward.3} parent=1 // pred_check_branch
      %37 = sbr.rel (0) target = $region17
    $region16: #{attention_forward.3} parent=1 // pred_region
      %38 = dma.done [#allocation6], 256
    $region17: #{attention_forward.3} parent=1 // pred_fallthru
      _
    %p40 = scmp.eq.s32.totalorder 0, 0
    // Predicated region
    $region18: #{attention_forward.3} parent=1 // pred_check
      %p41 = pneg %p40
    $region19: #{attention_forward.3} parent=1 // pred_check_branch
      %43 = sbr.rel (%p41) target = $region21
    $region20: #{attention_forward.3} parent=1 // pred_region
      %vm44 = vcmask 523264
      %45 = vst.msk [vmem:[#allocation2] sm:$0xff] %vm44, 0.0
      %46 = vst.msk [vmem:[#allocation2 + $0x8] sm:$0xff] %vm44, 0.0
    $region21: #{attention_forward.3} parent=1 // pred_fallthru
      _
    %v47 = vld [vmem:[#allocation2] sm:$0xff]
    %v48 = vld [vmem:[#allocation2 + $0x8] sm:$0xff]
    %v49 = vld [vmem:[#allocation3] sm:$0xff]
    %v50 = vld [vmem:[#allocation3 + $0x8] sm:$0xff]
    %v51 = vpack.c.bf16 %v50, %v49
    %v52 = vld [vmem:[#allocation5] sm:$0xf]
    %v53 = vld [vmem:[#allocation5 + $0x4] sm:$0xf]
    %v54 = vld [vmem:[#allocation5 + $0x8] sm:$0xf]
    %v55 = vld [vmem:[#allocation5 + $0xc] sm:$0xf]
    %v60 = vunpack.c.l.b16 %v52
    %v61 = vunpack.c.l.b16 %v53
    %v62 = vunpack.c.l.b16 %v54
    %v63 = vunpack.c.l.b16 %v55
    %v64 = vpack.c.b16 %v61, %v60
    %v65 = vpack.c.b16 %v63, %v62
    %vm68 = vcmask 261120
    %v70 = vsel %vm68, %v51, 0
    %72 = vmatprep.subr.bf16.mxu0 0
    %73 = vmatpush1.bf16.msra.mxu0 0
    %74 = vmatprep.subr.bf16.mxu0 0
    %75 = vmatpush1.bf16.msra.mxu0 0
    %76 = vmatprep.subr.bf16.mxu0 0
    %77 = vmatpush1.bf16.msra.mxu0 0
    %78 = vmatprep.subr.bf16.mxu0 0
    %79 = vmatpush1.bf16.msra.mxu0 0
    %80 = vmatprep.subr.bf16.mxu0 0
    %81 = vmatpush1.bf16.msra.mxu0 0
    %82 = vmatprep.subr.bf16.mxu0 0
    %83 = vmatpush1.bf16.msra.mxu0 0
    %84 = vmatprep.subr.bf16.mxu0 0
    %85 = vmatpush1.bf16.msra.mxu0 %v65
    %86 = vmatprep.subr.bf16.mxu0 0
    %87 = vmatpush1.bf16.msra.mxu0 %v64
    %88 = vmatprep.subr.bf16.mxu0 0
    %89 = vmatpush2.bf16.msra.mxu0 0
    %90 = vmatprep.subr.bf16.mxu0 0
    %91 = vmatpush2.bf16.msra.mxu0 0
    %92 = vmatprep.subr.bf16.mxu0 0
    %93 = vmatpush2.bf16.msra.mxu0 0
    %94 = vmatprep.subr.bf16.mxu0 0
    %95 = vmatpush2.bf16.msra.mxu0 0
    %96 = vmatprep.subr.bf16.mxu0 0
    %97 = vmatpush2.bf16.msra.mxu0 0
    %98 = vmatprep.subr.bf16.mxu0 0
    %99 = vmatpush2.bf16.msra.mxu0 0
    %100 = vmatprep.subr.bf16.mxu0 0
    %101 = vmatpush2.bf16.msra.mxu0 0
    %102 = vmatprep.subr.bf16.mxu0 0
    %103 = vmatpush2.bf16.msra.mxu0 0
    %104 = vmatprep.mubr.bf16.mxu0 0
    %105 = vmatmul.mubr.bf16.gmra.mxu0 %v70
    %v106 = vpop.f32.mrf.mxu0
    %v107 = vadd.f32 0.0, %v106
    %v108 = vpop.f32.mrf.mxu0
    %v109 = vpop.f32.mrf.mxu0
    %v110 = vadd.f32 0.0, %v109
    %v111 = vpop.f32.mrf.mxu0
    %112 = vdwg.mxu0
    %v113 = vadd.f32 %v47, %v107
    %v114 = vadd.f32 %v48, %v110
    %vm115 = vcmask 523264
    %116 = vst.msk [vmem:[#allocation2] sm:$0xff] %vm115, %v113
    %117 = vst.msk [vmem:[#allocation2 + $0x8] sm:$0xff] %vm115, %v114
    // Predicated region
    $region22: #{attention_forward.3} parent=1 // pred_check
      %p118 = pneg %p40
    $region23: #{attention_forward.3} parent=1 // pred_check_branch
      %120 = sbr.rel (%p118) target = $region25
    $region24: #{attention_forward.3} parent=1 // pred_region
      %v121 = vld [vmem:[#allocation2] sm:$0xff]
      %v122 = vld [vmem:[#allocation2 + $0x8] sm:$0xff]
      %v123 = vpack.c.bf16 %v122, %v121
      %v125 = vunpack.c.l.b16 %v123
      %v126 = vunpack.c.h.b16 %v123
      %v127 = vpack.c.b16 %v125, %v125
      %v128 = vpack.c.b16 %v126, %v126
      %vm131 = vcmask 519168
      %132 = vst.msk [vmem:[%s2] sm:$0xf] %vm131, %v127
      %133 = vst.msk [vmem:[%s2 + $0x4] sm:$0xf] %vm131, %v128
    $region25: #{attention_forward.3} parent=1 // pred_fallthru
      _
    // Predicated region
    $region26: #{attention_forward.3} parent=1 // pred_check
      _
    $region27: #{attention_forward.3} parent=1 // pred_check_branch
      %135 = sbr.rel (0) target = $region29
    $region28: #{attention_forward.3} parent=1 // pred_region
      _
    $region29: #{attention_forward.3} parent=1 // pred_fallthru
      _
    // Predicated region
    $region30: #{attention_forward.3} parent=1 // pred_check
      _
    $region31: #{attention_forward.3} parent=1 // pred_check_branch
      %137 = sbr.rel (0) target = $region33
    $region32: #{attention_forward.3} parent=1 // pred_region
      _
    $region33: #{attention_forward.3} parent=1 // pred_fallthru
      _
    %138 = vsyncpa [#allocation4], 1
    %139 = vsyncpa [#allocation6], 1

// kernel: attention_forward.5
$region0: #{attention_forward.5}
  #allocation0 [shape = 'u32[]', space=smem, size = 0x4, offset = 0x4, fixed_abs, tag = 'smem constant byte address 0x4 - core index']
  #allocation1 [shape = 'u32[144,128]{1,0:T(1,128)}', space=vmem, size = 0x12000, scoped, tag = 'internal scratch']
  #allocation2 [shape = 'f32[16,32]{1,0:T(8,128)}', space=vmem, size = 0x2000, scoped, tag = 'scratch operand']
  %s0 = inlined_call_operand.vmem [shape: bf16[16,32], index: 0, kind: input, shape index: {}]
  %s1 = inlined_call_operand.vmem [shape: bf16[32,32], index: 1, kind: input, shape index: {}]
  %s2 = inlined_call_operand.hbm [shape: f32[16,32], index: 2, kind: output, shape index: {}]
  %s3 = sld [smem:[#allocation0]]
  $region26: #{attention_forward.5} parent=0
    _
  %s5 = ssub.s32 1, %s3
  %s6 = scalar_select 0, %s5, %s3
  $region1: #{attention_forward.5} parent=0
    #allocation3 [shape = 'u8[8192]{0}', space=vmem, size = 0x2000, scoped, tag = 'output window, operand 0, single buffered']
    #allocation4 [shape = 's32[1]{0}', space=sflag, size = 0x4, scoped, tag = 'scoped memory for attention_forward.5']
    %7 = vsyncpa [#allocation4], 0
    // Predicated region
    $region2: #{attention_forward.5} parent=1 // pred_check
      _
    $region3: #{attention_forward.5} parent=1 // pred_check_branch
      %9 = sbr.rel (0) target = $region5
    $region4: #{attention_forward.5} parent=1 // pred_region
      _
    $region5: #{attention_forward.5} parent=1 // pred_fallthru
      _
    // Predicated region
    $region6: #{attention_forward.5} parent=1 // pred_check
      _
    $region7: #{attention_forward.5} parent=1 // pred_check_branch
      %11 = sbr.rel (0) target = $region9
    $region8: #{attention_forward.5} parent=1 // pred_region
      _
    $region9: #{attention_forward.5} parent=1 // pred_fallthru
      _
    %p13 = scmp.eq.s32.totalorder 0, 0
    // Predicated region
    $region10: #{attention_forward.5} parent=1 // pred_check
      %p14 = pneg %p13
    $region11: #{attention_forward.5} parent=1 // pred_check_branch
      %16 = sbr.rel (%p14) target = $region13
    $region12: #{attention_forward.5} parent=1 // pred_region
      %vm17 = vcmask 261120
      %18 = vst.msk [vmem:[#allocation2] sm:$0xff] %vm17, 0.0
      %19 = vst.msk [vmem:[#allocation2 + $0x8] sm:$0xff] %vm17, 0.0
    $region13: #{attention_forward.5} parent=1 // pred_fallthru
      _
    %v20 = vld [vmem:[#allocation2] sm:$0xff]
    %v21 = vld [vmem:[#allocation2 + $0x8] sm:$0xff]
    %v22 = vld [vmem:[%s0] sm:$0xf]
    %v23 = vld [vmem:[%s0 + $0x4] sm:$0xf]
    %v24 = vld [vmem:[%s1] sm:$0xf]
    %v25 = vld [vmem:[%s1 + $0x4] sm:$0xf]
    %v26 = vld [vmem:[%s1 + $0x8] sm:$0xf]
    %v27 = vld [vmem:[%s1 + $0xc] sm:$0xf]
    %v30 = vunpack.c.l.b16 %v22
    %v31 = vunpack.c.l.b16 %v23
    %v32 = vpack.c.b16 %v31, %v30
    %v37 = vunpack.c.l.b16 %v24
    %v38 = vunpack.c.l.b16 %v25
    %v39 = vunpack.c.l.b16 %v26
    %v40 = vunpack.c.l.b16 %v27
    %v41 = vpack.c.b16 %v38, %v37
    %v42 = vpack.c.b16 %v40, %v39
    %vm45 = vcmask 261120
    %v47 = vsel %vm45, %v32, 0
    %49 = vmatprep.subr.bf16.mxu0 0
    %50 = vmatpush1.bf16.msra.mxu0 0
    %51 = vmatprep.subr.bf16.mxu0 0
    %52 = vmatpush1.bf16.msra.mxu0 0
    %53 = vmatprep.subr.bf16.mxu0 0
    %54 = vmatpush1.bf16.msra.mxu0 0
    %55 = vmatprep.subr.bf16.mxu0 0
    %56 = vmatpush1.bf16.msra.mxu0 0
    %57 = vmatprep.subr.bf16.mxu0 0
    %58 = vmatpush1.bf16.msra.mxu0 0
    %59 = vmatprep.subr.bf16.mxu0 0
    %60 = vmatpush1.bf16.msra.mxu0 0
    %61 = vmatprep.subr.bf16.mxu0 0
    %62 = vmatpush1.bf16.msra.mxu0 %v42
    %63 = vmatprep.subr.bf16.mxu0 0
    %64 = vmatpush1.bf16.msra.mxu0 %v41
    %65 = vmatprep.subr.bf16.mxu0 0
    %66 = vmatpush2.bf16.msra.mxu0 0
    %67 = vmatprep.subr.bf16.mxu0 0
    %68 = vmatpush2.bf16.msra.mxu0 0
    %69 = vmatprep.subr.bf16.mxu0 0
    %70 = vmatpush2.bf16.msra.mxu0 0
    %71 = vmatprep.subr.bf16.mxu0 0
    %72 = vmatpush2.bf16.msra.mxu0 0
    %73 = vmatprep.subr.bf16.mxu0 0
    %74 = vmatpush2.bf16.msra.mxu0 0
    %75 = vmatprep.subr.bf16.mxu0 0
    %76 = vmatpush2.bf16.msra.mxu0 0
    %77 = vmatprep.subr.bf16.mxu0 0
    %78 = vmatpush2.bf16.msra.mxu0 0
    %79 = vmatprep.subr.bf16.mxu0 0
    %80 = vmatpush2.bf16.msra.mxu0 0
    %81 = vmatprep.mubr.bf16.mxu0 0
    %82 = vmatmul.mubr.bf16.gmra.mxu0 %v47
    %v83 = vpop.f32.mrf.mxu0
    %v84 = vadd.f32 0.0, %v83
    %v85 = vpop.f32.mrf.mxu0
    %v86 = vpop.f32.mrf.mxu0
    %v87 = vadd.f32 0.0, %v86
    %v88 = vpop.f32.mrf.mxu0
    %89 = vdwg.mxu0
    %v90 = vadd.f32 %v20, %v84
    %v91 = vadd.f32 %v21, %v87
    %92 = vst.msk [vmem:[#allocation2] sm:$0xff] %vm45, %v90
    %93 = vst.msk [vmem:[#allocation2 + $0x8] sm:$0xff] %vm45, %v91
    // Predicated region
    $region14: #{attention_forward.5} parent=1 // pred_check
      %p94 = pneg %p13
    $region15: #{attention_forward.5} parent=1 // pred_check_branch
      %96 = sbr.rel (%p94) target = $region17
    $region16: #{attention_forward.5} parent=1 // pred_region
      %v97 = vld [vmem:[#allocation2] sm:$0xff]
      %v98 = vld [vmem:[#allocation2 + $0x8] sm:$0xff]
      %99 = vst.msk [vmem:[#allocation3] sm:$0xff] %vm45, %v97
      %100 = vst.msk [vmem:[#allocation3 + $0x8] sm:$0xff] %vm45, %v98
    $region17: #{attention_forward.5} parent=1 // pred_fallthru
      _
    // Predicated region
    $region18: #{attention_forward.5} parent=1 // pred_check
      _
    $region19: #{attention_forward.5} parent=1 // pred_check_branch
      %102 = sbr.rel (0) target = $region21
    $region20: #{attention_forward.5} parent=1 // pred_region
      %s104 = ssub.s32 256, 256
      %105 = vsyncadd [#allocation4], %s104
      %s106 = sshll.u32 [#allocation3], 4
      %s107 = int_to_ptr.vmem [resolvable:$true] %s106
      %112 = dma.vmem_to_hbm [thread:$0]  %s107, 256, %s2, [#allocation4], 128, 128, 8
    $region21: #{attention_forward.5} parent=1 // pred_fallthru
      _
    // Predicated region
    $region22: #{attention_forward.5} parent=1 // pred_check
      _
    $region23: #{attention_forward.5} parent=1 // pred_check_branch
      %114 = sbr.rel (0) target = $region25
    $region24: #{attention_forward.5} parent=1 // pred_region
      %115 = dma.done [#allocation4], 256
    $region25: #{attention_forward.5} parent=1 // pred_fallthru
      _
    %116 = vsyncpa [#allocation4], 1

// kernel: attention_forward.4
$region0: #{attention_forward.4}
  #allocation0 [shape = 'u32[]', space=smem, size = 0x4, offset = 0x4, fixed_abs, tag = 'smem constant byte address 0x4 - core index']
  #allocation1 [shape = 'u32[144,128]{1,0:T(1,128)}', space=vmem, size = 0x12000, scoped, tag = 'internal scratch']
  #allocation2 [shape = 'f32[2,8,1]{2,1,0:T(8,128)}', space=vmem, size = 0x2000, scoped, tag = 'scratch operand']
  #allocation3 [shape = 'f32[2,8,1]{2,1,0:T(8,128)}', space=vmem, size = 0x2000, scoped, tag = 'scratch operand']
  #allocation4 [shape = 'f32[2,8,8]{2,1,0:T(8,128)}', space=vmem, size = 0x2000, scoped, tag = 'scratch operand']
  %s0 = inlined_call_operand.vmem [shape: bf16[4,8,16], index: 0, kind: input, shape index: {}]
  %s1 = inlined_call_operand.vmem [shape: bf16[4,8,8], index: 1, kind: input, shape index: {}]
  %s2 = inlined_call_operand.vmem [shape: bf16[4,8,8], index: 2, kind: input, shape index: {}]
  %s3 = inlined_call_operand.vmem [shape: bf16[4,8,16], index: 3, kind: output, shape index: {}]
  %s4 = sld [smem:[#allocation0]]
  $region53: #{attention_forward.4} parent=0
    _
  %s6 = ssub.s32 1, %s4
  %s7 = scalar_select 0, %s6, %s4
  loop: start=0, step=1, limit=6
  $region2: #{attention_forward.4} parent=0 // loop_pre_header
    _
  $region3: #{attention_forward.4} parent=0 // loop_header
    %s9 = sphi 0, %s13
    %p10 = scmp.ge.s32.totalorder %s9, 6
    %s16 = sphi 0, %s35
    %s17 = sphi 0, %s31
    %s18 = sphi 0, %s27
    %s19 = sphi 0, %s16
    %s20 = sphi 0, %s17
    %s21 = sphi 0, %s18
    %s22 = sphi 0, %s19
    %s23 = sphi 0, %s20
    %s24 = sphi 0, %s21
    %s40 = sphi 0, %s42
    %s43 = sphi 0, %s40
    %s44 = sphi 0, %s43
    %s60 = sphi 0, %s44
    %s68 = sphi 0, %s70
    %s71 = sphi 0, %s68
    %s72 = sphi 0, %s71
    %s88 = sphi 0, %s72
    %s96 = sphi 0, %s98
    %s99 = sphi 0, %s96
    %s100 = sphi 0, %s99
    %s116 = sphi 0, %s100
    %s124 = sphi 0, %s126
    %s127 = sphi 0, %s124
    %s128 = sphi 0, %s127
    %s144 = sphi 0, %s128
  $region4: #{attention_forward.4} parent=0 // loop_header_branch
    %12 = sbr.rel (%p10) target = $region8
  $region5: #{attention_forward.4} parent=0 // loop_body
    %s14 = ssub.s32 %s9, 1
    %s15 = ssub.s32 %s9, 2
    %s25 = sadd.s32 1, %s18
    %p26 = scmp.ge.s32.totalorder %s25, 1
    %s27 = scalar_select %p26, 0, %s25
    %s28 = sadd.s32 1, %s17
    %s29 = scalar_select %p26, %s28, %s17
    %p30 = scmp.ge.s32.totalorder %s29, 1
    %s31 = scalar_select %p30, 0, %s29
    %s32 = sadd.s32 1, %s16
    %s33 = scalar_select %p30, %s32, %s16
    %p34 = scmp.ge.s32.totalorder %s33, 4
    %s35 = scalar_select %p34, 0, %s33
    %s36 = ssub.s32 %s16, %s35
    %s37 = ssub.s32 %s17, %s31
    %s38 = sor.u32 %s36, %s37
    %p39 = scmp.eq.s32.totalorder %s38, 0
    %s41 = sadd.s32 %s40, 1
    %s42 = scalar_select %p39, %s40, %s41
    %p45 = pneg %p39
    %p46 = scmp.eq.s32.totalorder %s9, 3
    %p47 = por %p45, %p46
    %p48 = scmp.ne.s32.totalorder %s40, %s43
    %p49 = scmp.eq.s32.totalorder %s9, 0
    %p50 = por %p48, %p49
    %p51 = scmp.ne.s32.totalorder %s40, %s43
    %p52 = scmp.eq.s32.totalorder %s14, 3
    %p53 = por %p51, %p52
    %p54 = scmp.ne.s32.totalorder %s43, %s44
    %p55 = scmp.eq.s32.totalorder %s14, 0
    %p56 = por %p54, %p55
    %p57 = scmp.ne.s32.totalorder %s43, %s44
    %p58 = scmp.eq.s32.totalorder %s15, 3
    %p59 = por %p57, %p58
    %p61 = scmp.ne.s32.totalorder %s44, %s60
    %p62 = scmp.eq.s32.totalorder %s15, 0
    %p63 = por %p61, %p62
    %s64 = ssub.s32 %s16, %s35
    %s65 = ssub.s32 %s18, %s27
    %s66 = sor.u32 %s64, %s65
    %p67 = scmp.eq.s32.totalorder %s66, 0
    %s69 = sadd.s32 %s68, 1
    %s70 = scalar_select %p67, %s68, %s69
    %p73 = pneg %p67
    %p74 = scmp.eq.s32.totalorder %s9, 3
    %p75 = por %p73, %p74
    %p76 = scmp.ne.s32.totalorder %s68, %s71
    %p77 = scmp.eq.s32.totalorder %s9, 0
    %p78 = por %p76, %p77
    %p79 = scmp.ne.s32.totalorder %s68, %s71
    %p80 = scmp.eq.s32.totalorder %s14, 3
    %p81 = por %p79, %p80
    %p82 = scmp.ne.s32.totalorder %s71, %s72
    %p83 = scmp.eq.s32.totalorder %s14, 0
    %p84 = por %p82, %p83
    %p85 = scmp.ne.s32.totalorder %s71, %s72
    %p86 = scmp.eq.s32.totalorder %s15, 3
    %p87 = por %p85, %p86
    %p89 = scmp.ne.s32.totalorder %s72, %s88
    %p90 = scmp.eq.s32.totalorder %s15, 0
    %p91 = por %p89, %p90
    %s92 = ssub.s32 %s16, %s35
    %s93 = ssub.s32 %s18, %s27
    %s94 = sor.u32 %s92, %s93
    %p95 = scmp.eq.s32.totalorder %s94, 0
    %s97 = sadd.s32 %s96, 1
    %s98 = scalar_select %p95, %s96, %s97
    %p101 = pneg %p95
    %p102 = scmp.eq.s32.totalorder %s9, 3
    %p103 = por %p101, %p102
    %p104 = scmp.ne.s32.totalorder %s96, %s99
    %p105 = scmp.eq.s32.totalorder %s9, 0
    %p106 = por %p104, %p105
    %p107 = scmp.ne.s32.totalorder %s96, %s99
    %p108 = scmp.eq.s32.totalorder %s14, 3
    %p109 = por %p107, %p108
    %p110 = scmp.ne.s32.totalorder %s99, %s100
    %p111 = scmp.eq.s32.totalorder %s14, 0
    %p112 = por %p110, %p111
    %p113 = scmp.ne.s32.totalorder %s99, %s100
    %p114 = scmp.eq.s32.totalorder %s15, 3
    %p115 = por %p113, %p114
    %p117 = scmp.ne.s32.totalorder %s100, %s116
    %p118 = scmp.eq.s32.totalorder %s15, 0
    %p119 = por %p117, %p118
    %s120 = ssub.s32 %s16, %s35
    %s121 = ssub.s32 %s17, %s31
    %s122 = sor.u32 %s120, %s121
    %p123 = scmp.eq.s32.totalorder %s122, 0
    %s125 = sadd.s32 %s124, 1
    %s126 = scalar_select %p123, %s124, %s125
    %p129 = pneg %p123
    %p130 = scmp.eq.s32.totalorder %s9, 3
    %p131 = por %p129, %p130
    %p132 = scmp.ne.s32.totalorder %s124, %s127
    %p133 = scmp.eq.s32.totalorder %s9, 0
    %p134 = por %p132, %p133
    %p135 = scmp.ne.s32.totalorder %s124, %s127
    %p136 = scmp.eq.s32.totalorder %s14, 3
    %p137 = por %p135, %p136
    %p138 = scmp.ne.s32.totalorder %s127, %s128
    %p139 = scmp.eq.s32.totalorder %s14, 0
    %p140 = por %p138, %p139
    %p141 = scmp.ne.s32.totalorder %s127, %s128
    %p142 = scmp.eq.s32.totalorder %s15, 3
    %p143 = por %p141, %p142
    %p145 = scmp.ne.s32.totalorder %s128, %s144
    %p146 = scmp.eq.s32.totalorder %s15, 0
    %p147 = por %p145, %p146
    %p148 = scmp.le.s32.totalorder 1, %s9
    %p149 = scmp.lt.s32.totalorder %s9, 5
    %p150 = pnand %p148, %p149
    %p151 = pneg %p150
    // Predicated region
    $region9: #{attention_forward.4} parent=5 // pred_check
      _
    $region10: #{attention_forward.4} parent=5 // pred_check_branch
      %153 = sbr.rel (%p150) target = $region12
    $region11: #{attention_forward.4} parent=5 // pred_region
      %s154 = ssub.s32 %s9, 1
    $region12: #{attention_forward.4} parent=5 // pred_fallthru
      _
    %p155 = scmp.lt.s32.totalorder %s9, 4
    // Predicated region
    $region13: #{attention_forward.4} parent=5 // pred_check
      %p156 = pneg %p155
    $region14: #{attention_forward.4} parent=5 // pred_check_branch
      %158 = sbr.rel (%p156) target = $region16
    $region15: #{attention_forward.4} parent=5 // pred_region
      // Predicated region
      $region17: #{attention_forward.4} parent=15 // pred_check
        %p159 = pneg %p50
      $region18: #{attention_forward.4} parent=15 // pred_check_branch
        %161 = sbr.rel (%p159) target = $region20
      $region19: #{attention_forward.4} parent=15 // pred_region
        %p162 = scmp.lt.s32.totalorder %s16, 3
        %s163 = scalar_select %p162, %s16, 3
        %p164 = scmp.lt.s32.totalorder %s17, 0
        %s165 = scalar_select %p164, %s17, 0
        %s166 = sadd.s32 %s165, %s163
        %s167 = smul.addr %s166, 4
        %s168 = scalar_lea.vmem %s0, %s167
      $region20: #{attention_forward.4} parent=15 // pred_fallthru
        _
      // Predicated region
      $region21: #{attention_forward.4} parent=15 // pred_check
        %p169 = pneg %p78
      $region22: #{attention_forward.4} parent=15 // pred_check_branch
        %171 = sbr.rel (%p169) target = $region24
      $region23: #{attention_forward.4} parent=15 // pred_region
        %p172 = scmp.lt.s32.totalorder %s16, 3
        %s173 = scalar_select %p172, %s16, 3
        %p174 = scmp.lt.s32.totalorder %s18, 0
        %s175 = scalar_select %p174, %s18, 0
        %s176 = sadd.s32 %s175, %s173
        %s177 = smul.addr %s176, 4
        %s178 = scalar_lea.vmem %s1, %s177
      $region24: #{attention_forward.4} parent=15 // pred_fallthru
        _
      // Predicated region
      $region25: #{attention_forward.4} parent=15 // pred_check
        %p179 = pneg %p106
      $region26: #{attention_forward.4} parent=15 // pred_check_branch
        %181 = sbr.rel (%p179) target = $region28
      $region27: #{attention_forward.4} parent=15 // pred_region
        %p182 = scmp.lt.s32.totalorder %s16, 3
        %s183 = scalar_select %p182, %s16, 3
        %p184 = scmp.lt.s32.totalorder %s18, 0
        %s185 = scalar_select %p184, %s18, 0
        %s186 = sadd.s32 %s185, %s183
        %s187 = smul.addr %s186, 4
        %s188 = scalar_lea.vmem %s2, %s187
      $region28: #{attention_forward.4} parent=15 // pred_fallthru
        _
    $region16: #{attention_forward.4} parent=5 // pred_fallthru
      _
    %p189 = scmp.le.s32.totalorder 1, %s9
    %p190 = scmp.lt.s32.totalorder %s9, 5
    %p191 = pnand %p189, %p190
    %p192 = pneg %p191
    // Predicated region
    $region29: #{attention_forward.4} parent=5 // pred_check
      _
    $region30: #{attention_forward.4} parent=5 // pred_check_branch
      %194 = sbr.rel (%p191) target = $region32
    $region31: #{attention_forward.4} parent=5 // pred_region
      %s195 = ssub.s32 %s9, 1
      %p196 = scmp.lt.s32.totalorder %s19, 3
      %s197 = scalar_select %p196, %s19, 3
      %p198 = scmp.lt.s32.totalorder %s20, 0
      %s199 = scalar_select %p198, %s20, 0
      %s200 = sadd.s32 %s199, %s197
      %s201 = smul.addr %s200, 4
      %s202 = scalar_lea.vmem %s0, %s201
      %p203 = pneg %p56
      %p204 = pneg %p53
      %p205 = scmp.lt.s32.totalorder %s19, 3
      %s206 = scalar_select %p205, %s19, 3
      %p207 = scmp.lt.s32.totalorder %s21, 0
      %s208 = scalar_select %p207, %s21, 0
      %s209 = sadd.s32 %s208, %s206
      %s210 = smul.addr %s209, 4
      %s211 = scalar_lea.vmem %s1, %s210
      %p212 = pneg %p84
      %p213 = pneg %p81
      %p214 = scmp.lt.s32.totalorder %s19, 3
      %s215 = scalar_select %p214, %s19, 3
      %p216 = scmp.lt.s32.totalorder %s21, 0
      %s217 = scalar_select %p216, %s21, 0
      %s218 = sadd.s32 %s217, %s215
      %s219 = smul.addr %s218, 4
      %s220 = scalar_lea.vmem %s2, %s219
      %p221 = pneg %p112
      %p222 = pneg %p109
      %p223 = pneg %p140
      %p224 = pneg %p137
      %p225 = scmp.lt.s32.totalorder %s19, 3
      %s226 = scalar_select %p225, %s19, 3
      %p227 = scmp.lt.s32.totalorder %s20, 0
      %s228 = scalar_select %p227, %s20, 0
      %s229 = sadd.s32 %s228, %s226
      %s230 = smul.addr %s229, 4
      %s231 = scalar_lea.vmem %s3, %s230
      %p232 = scmp.lt.s32.totalorder %s19, 3
      %s233 = scalar_select %p232, %s19, 3
      %p234 = scmp.lt.s32.totalorder %s20, 0
      %s235 = scalar_select %p234, %s20, 0
      %s236 = sadd.s32 %s235, %s233
      %s237 = smul.addr %s236, 4
      %s238 = scalar_lea.vmem %s0, %s237
      %p239 = scmp.lt.s32.totalorder %s19, 3
      %s240 = scalar_select %p239, %s19, 3
      %p241 = scmp.lt.s32.totalorder %s21, 0
      %s242 = scalar_select %p241, %s21, 0
      %s243 = sadd.s32 %s242, %s240
      %s244 = smul.addr %s243, 4
      %s245 = scalar_lea.vmem %s1, %s244
      %p246 = scmp.lt.s32.totalorder %s19, 3
      %s247 = scalar_select %p246, %s19, 3
      %p248 = scmp.lt.s32.totalorder %s21, 0
      %s249 = scalar_select %p248, %s21, 0
      %s250 = sadd.s32 %s249, %s247
      %s251 = smul.addr %s250, 4
      %s252 = scalar_lea.vmem %s2, %s251
      %p253 = scmp.lt.s32.totalorder %s19, 3
      %s254 = scalar_select %p253, %s19, 3
      %p255 = scmp.lt.s32.totalorder %s20, 0
      %s256 = scalar_select %p255, %s20, 0
      %s257 = sadd.s32 %s256, %s254
      %s258 = smul.addr %s257, 4
      %s259 = scalar_lea.vmem %s3, %s258
      %p261 = scmp.eq.s32.totalorder %s21, 0
      // Predicated region
      $region33: #{attention_forward.4} parent=31 // pred_check
        %p262 = pneg %p261
      $region34: #{attention_forward.4} parent=31 // pred_check_branch
        %264 = sbr.rel (%p262) target = $region36
      $region35: #{attention_forward.4} parent=31 // pred_region
        %vm265 = vcmask 7168
        %266 = vst.msk [vmem:[#allocation2] sm:$0xff] %vm265, -inf
        %267 = vst.msk [vmem:[#allocation2 + $0x8] sm:$0xff] %vm265, -inf
        %268 = vst.msk [vmem:[#allocation3] sm:$0xff] %vm265, 0.0
        %269 = vst.msk [vmem:[#allocation3 + $0x8] sm:$0xff] %vm265, 0.0
        %vm270 = vcmask 64512
        %271 = vst.msk [vmem:[#allocation4] sm:$0xff] %vm270, 0.0
        %272 = vst.msk [vmem:[#allocation4 + $0x8] sm:$0xff] %vm270, 0.0
      $region36: #{attention_forward.4} parent=31 // pred_fallthru
        _
      %v273 = vld [vmem:[%s245] sm:$0xf]
      %v274 = vld [vmem:[%s252] sm:$0xf]
      %v275 = vld [vmem:[%s238] sm:$0xf]
      %vm276 = vcmask 64512
      %v278 = vsel %vm276, %v275, 0
      %v281 = vsel %vm276, %v273, 0
      %283 = vmatprep.subr.bf16.mxu0 0
      %284 = vmatpush1.bf16.xpose.msra.mxu0 0
      %285 = vmatprep.subr.bf16.mxu0 0
      %286 = vmatpush1.bf16.xpose.msra.mxu0 0
      %287 = vmatprep.subr.bf16.mxu0 0
      %288 = vmatpush1.bf16.xpose.msra.mxu0 0
      %289 = vmatprep.subr.bf16.mxu0 0
      %290 = vmatpush1.bf16.xpose.msra.mxu0 0
      %291 = vmatprep.subr.bf16.mxu0 0
      %292 = vmatpush1.bf16.xpose.msra.mxu0 0
      %293 = vmatprep.subr.bf16.mxu0 0
      %294 = vmatpush1.bf16.xpose.msra.mxu0 0
      %295 = vmatprep.subr.bf16.mxu0 0
      %296 = vmatpush1.bf16.xpose.msra.mxu0 0
      %297 = vmatprep.subr.bf16.mxu0 0
      %298 = vmatpush1.bf16.xpose.msra.mxu0 %v281
      %299 = vmatprep.subr.bf16.mxu0 0
      %300 = vmatpush2.bf16.xpose.msra.mxu0 0
      %301 = vmatprep.subr.bf16.mxu0 0
      %302 = vmatpush2.bf16.xpose.msra.mxu0 0
      %303 = vmatprep.subr.bf16.mxu0 0
      %304 = vmatpush2.bf16.xpose.msra.mxu0 0
      %305 = vmatprep.subr.bf16.mxu0 0
      %306 = vmatpush2.bf16.xpose.msra.mxu0 0
      %307 = vmatprep.subr.bf16.mxu0 0
      %308 = vmatpush2.bf16.xpose.msra.mxu0 0
      %309 = vmatprep.subr.bf16.mxu0 0
      %310 = vmatpush2.bf16.xpose.msra.mxu0 0
      %311 = vmatprep.subr.bf16.mxu0 0
      %312 = vmatpush2.bf16.xpose.msra.mxu0 0
      %313 = vmatprep.subr.bf16.mxu0 0
      %314 = vmatpush2.bf16.xpose.msra.mxu0 0
      %315 = vmatprep.mubr.bf16.mxu0 0
      %316 = vmatmul.mubr.bf16.gmra.mxu0 %v278
      %v317 = vpop.f32.mrf.mxu0
      %v318 = vadd.f32 0.0, %v317
      %v319 = vpop.f32.mrf.mxu0
      %v320 = vpop.f32.mrf.mxu0
      %v321 = vpop.f32.mrf.mxu0
      %322 = vdwg.mxu0
      %v323 = vld [vmem:[#allocation2] sm:$0xff]
      %v324 = vsel %vm276, %v318, -inf
      %325 = vmax.xlane.f32.xlu0 %v324
      %v326 = vpop.xlane.xlu0 %325
      %v327 = vmax.f32 %v323, %v326
      %v328 = vsub.f32 %v323, %v327
      %v329 = vmul.f32 %v328, 1.442695
      %v330 = vpow.pop %v329
      %332 = vset.pattern.permute.xlu0 0
      %333 = vperm.xlu0 %332, %v327
      %v334 = vpop.permute.xlu0 %333
      %v336 = vsub.f32 %v318, %v334
      %v337 = vmul.f32 %v336, 1.442695
      %v338 = vpow.pop %v337
      %v339 = vld [vmem:[#allocation3] sm:$0xff]
      %v340 = vmul.f32 %v330, %v339
      %v341 = vsel %vm276, %v338, 0.0
      %342 = vadd.xlane.f32.xlu0 %v341
      %v343 = vpop.xlane.xlu0 %342
      %v344 = vadd.f32 %v340, %v343
      %vm345 = vcmask 7168
      %346 = vst.msk [vmem:[#allocation3] sm:$0xff] %vm345, %v344
      %v347 = vld [vmem:[#allocation4] sm:$0xff]
      %349 = vset.pattern.permute.xlu0 0
      %350 = vperm.xlu0 %349, %v330
      %v351 = vpop.permute.xlu0 %350
      %v353 = vmul.f32 %v351, %v347
      %v354 = vpack.c.bf16 %v338, %v338
      %v356 = vsel %vm276, %v354, 0
      %vm358 = vcmask 1043456
      %v360 = vsel %vm358, %v274, 0
      %362 = vmatprep.subr.bf16.mxu0 0
      %363 = vmatpush1.bf16.msra.mxu0 0
      %364 = vmatprep.subr.bf16.mxu0 0
      %365 = vmatpush1.bf16.msra.mxu0 0
      %366 = vmatprep.subr.bf16.mxu0 0
      %367 = vmatpush1.bf16.msra.mxu0 0
      %368 = vmatprep.subr.bf16.mxu0 0
      %369 = vmatpush1.bf16.msra.mxu0 0
      %370 = vmatprep.subr.bf16.mxu0 0
      %371 = vmatpush1.bf16.msra.mxu0 0
      %372 = vmatprep.subr.bf16.mxu0 0
      %373 = vmatpush1.bf16.msra.mxu0 0
      %374 = vmatprep.subr.bf16.mxu0 0
      %375 = vmatpush1.bf16.msra.mxu0 0
      %376 = vmatprep.subr.bf16.mxu0 0
      %377 = vmatpush1.bf16.msra.mxu0 %v360
      %378 = vmatprep.subr.bf16.mxu0 0
      %379 = vmatpush2.bf16.msra.mxu0 0
      %380 = vmatprep.subr.bf16.mxu0 0
      %381 = vmatpush2.bf16.msra.mxu0 0
      %382 = vmatprep.subr.bf16.mxu0 0
      %383 = vmatpush2.bf16.msra.mxu0 0
      %384 = vmatprep.subr.bf16.mxu0 0
      %385 = vmatpush2.bf16.msra.mxu0 0
      %386 = vmatprep.subr.bf16.mxu0 0
      %387 = vmatpush2.bf16.msra.mxu0 0
      %388 = vmatprep.subr.bf16.mxu0 0
      %389 = vmatpush2.bf16.msra.mxu0 0
      %390 = vmatprep.subr.bf16.mxu0 0
      %391 = vmatpush2.bf16.msra.mxu0 0
      %392 = vmatprep.subr.bf16.mxu0 0
      %393 = vmatpush2.bf16.msra.mxu0 0
      %394 = vmatprep.mubr.bf16.mxu0 0
      %395 = vmatmul.mubr.bf16.gmra.mxu0 %v356
      %v396 = vpop.f32.mrf.mxu0
      %v397 = vadd.f32 0.0, %v396
      %v398 = vpop.f32.mrf.mxu0
      %v399 = vpop.f32.mrf.mxu0
      %v400 = vpop.f32.mrf.mxu0
      %401 = vdwg.mxu0
      %v402 = vadd.f32 %v353, %v397
      %403 = vst.msk [vmem:[#allocation4] sm:$0xff] %vm276, %v402
      %404 = vst.msk [vmem:[#allocation2] sm:$0xff] %vm345, %v327
      %v405 = vld [vmem:[%s238] sm:$0xf]
      %v407 = vunpack.c.l.b16 %v405
      %v408 = vpack.c.b16 %v407, %v407
      %409 = vrot.lane.b32.xlu0 %v408, 120
      %v410 = vpop.permute.xlu0 %409
      %v412 = vsel %vm276, %v410, 0
      %414 = vmatprep.subr.bf16.mxu0 0
      %415 = vmatpush1.bf16.xpose.msra.mxu0 0
      %416 = vmatprep.subr.bf16.mxu0 0
      %417 = vmatpush1.bf16.xpose.msra.mxu0 0
      %418 = vmatprep.subr.bf16.mxu0 0
      %419 = vmatpush1.bf16.xpose.msra.mxu0 0
      %420 = vmatprep.subr.bf16.mxu0 0
      %421 = vmatpush1.bf16.xpose.msra.mxu0 0
      %422 = vmatprep.subr.bf16.mxu0 0
      %423 = vmatpush1.bf16.xpose.msra.mxu0 0
      %424 = vmatprep.subr.bf16.mxu0 0
      %425 = vmatpush1.bf16.xpose.msra.mxu0 0
      %426 = vmatprep.subr.bf16.mxu0 0
      %427 = vmatpush1.bf16.xpose.msra.mxu0 0
      %428 = vmatprep.subr.bf16.mxu0 0
      %429 = vmatpush1.bf16.xpose.msra.mxu0 %v281
      %430 = vmatprep.subr.bf16.mxu0 0
      %431 = vmatpush2.bf16.xpose.msra.mxu0 0
      %432 = vmatprep.subr.bf16.mxu0 0
      %433 = vmatpush2.bf16.xpose.msra.mxu0 0
      %434 = vmatprep.subr.bf16.mxu0 0
      %435 = vmatpush2.bf16.xpose.msra.mxu0 0
      %436 = vmatprep.subr.bf16.mxu0 0
      %437 = vmatpush2.bf16.xpose.msra.mxu0 0
      %438 = vmatprep.subr.bf16.mxu0 0
      %439 = vmatpush2.bf16.xpose.msra.mxu0 0
      %440 = vmatprep.subr.bf16.mxu0 0
      %441 = vmatpush2.bf16.xpose.msra.mxu0 0
      %442 = vmatprep.subr.bf16.mxu0 0
      %443 = vmatpush2.bf16.xpose.msra.mxu0 0
      %444 = vmatprep.subr.bf16.mxu0 0
      %445 = vmatpush2.bf16.xpose.msra.mxu0 0
      %446 = vmatprep.mubr.bf16.mxu0 0
      %447 = vmatmul.mubr.bf16.gmra.mxu0 %v412
      %v448 = vpop.f32.mrf.mxu0
      %v449 = vadd.f32 0.0, %v448
      %v450 = vpop.f32.mrf.mxu0
      %v451 = vpop.f32.mrf.mxu0
      %v452 = vpop.f32.mrf.mxu0
      %453 = vdwg.mxu0
      %s454 = scalar_lea.vmem [#allocation2], 8
      %v455 = vld [vmem:[%s454] sm:$0xff]
      %v456 = vsel %vm276, %v449, -inf
      %457 = vmax.xlane.f32.xlu0 %v456
      %v458 = vpop.xlane.xlu0 %457
      %v459 = vmax.f32 %v455, %v458
      %v460 = vsub.f32 %v455, %v459
      %v461 = vmul.f32 %v460, 1.442695
      %v462 = vpow.pop %v461
      %464 = vset.pattern.permute.xlu0 0
      %465 = vperm.xlu0 %464, %v459
      %v466 = vpop.permute.xlu0 %465
      %v468 = vsub.f32 %v449, %v466
      %v469 = vmul.f32 %v468, 1.442695
      %v470 = vpow.pop %v469
      %s471 = scalar_lea.vmem [#allocation3], 8
      %v472 = vld [vmem:[%s471] sm:$0xff]
      %v473 = vmul.f32 %v462, %v472
      %v474 = vsel %vm276, %v470, 0.0
      %475 = vadd.xlane.f32.xlu0 %v474
      %v476 = vpop.xlane.xlu0 %475
      %v477 = vadd.f32 %v473, %v476
      %478 = vst.msk [vmem:[%s471] sm:$0xff] %vm345, %v477
      %s479 = scalar_lea.vmem [#allocation4], 8
      %v480 = vld [vmem:[%s479] sm:$0xff]
      %482 = vset.pattern.permute.xlu0 0
      %483 = vperm.xlu0 %482, %v462
      %v484 = vpop.permute.xlu0 %483
      %v486 = vmul.f32 %v484, %v480
      %v487 = vpack.c.bf16 %v470, %v470
      %v489 = vsel %vm276, %v487, 0
      %491 = vmatprep.subr.bf16.mxu0 0
      %492 = vmatpush1.bf16.msra.mxu0 0
      %493 = vmatprep.subr.bf16.mxu0 0
      %494 = vmatpush1.bf16.msra.mxu0 0
      %495 = vmatprep.subr.bf16.mxu0 0
      %496 = vmatpush1.bf16.msra.mxu0 0
      %497 = vmatprep.subr.bf16.mxu0 0
      %498 = vmatpush1.bf16.msra.mxu0 0
      %499 = vmatprep.subr.bf16.mxu0 0
      %500 = vmatpush1.bf16.msra.mxu0 0
      %501 = vmatprep.subr.bf16.mxu0 0
      %502 = vmatpush1.bf16.msra.mxu0 0
      %503 = vmatprep.subr.bf16.mxu0 0
      %504 = vmatpush1.bf16.msra.mxu0 0
      %505 = vmatprep.subr.bf16.mxu0 0
      %506 = vmatpush1.bf16.msra.mxu0 %v360
      %507 = vmatprep.subr.bf16.mxu0 0
      %508 = vmatpush2.bf16.msra.mxu0 0
      %509 = vmatprep.subr.bf16.mxu0 0
      %510 = vmatpush2.bf16.msra.mxu0 0
      %511 = vmatprep.subr.bf16.mxu0 0
      %512 = vmatpush2.bf16.msra.mxu0 0
      %513 = vmatprep.subr.bf16.mxu0 0
      %514 = vmatpush2.bf16.msra.mxu0 0
      %515 = vmatprep.subr.bf16.mxu0 0
      %516 = vmatpush2.bf16.msra.mxu0 0
      %517 = vmatprep.subr.bf16.mxu0 0
      %518 = vmatpush2.bf16.msra.mxu0 0
      %519 = vmatprep.subr.bf16.mxu0 0
      %520 = vmatpush2.bf16.msra.mxu0 0
      %521 = vmatprep.subr.bf16.mxu0 0
      %522 = vmatpush2.bf16.msra.mxu0 0
      %523 = vmatprep.mubr.bf16.mxu0 0
      %524 = vmatmul.mubr.bf16.gmra.mxu0 %v489
      %v525 = vpop.f32.mrf.mxu0
      %v526 = vadd.f32 0.0, %v525
      %v527 = vpop.f32.mrf.mxu0
      %v528 = vpop.f32.mrf.mxu0
      %v529 = vpop.f32.mrf.mxu0
      %530 = vdwg.mxu0
      %v531 = vadd.f32 %v486, %v526
      %532 = vst.msk [vmem:[%s479] sm:$0xff] %vm276, %v531
      %533 = vst.msk [vmem:[%s454] sm:$0xff] %vm345, %v459
      // Predicated region
      $region37: #{attention_forward.4} parent=31 // pred_check
        %p534 = pneg %p261
      $region38: #{attention_forward.4} parent=31 // pred_check_branch
        %536 = sbr.rel (%p534) target = $region40
      $region39: #{attention_forward.4} parent=31 // pred_region
        %v537 = vld [vmem:[#allocation3] sm:$0xff]
        %v538 = vrcp.pop %v537
        %v539 = vld [vmem:[#allocation4] sm:$0xff]
        %541 = vset.pattern.permute.xlu0 0
        %542 = vperm.xlu0 %541, %v538
        %v543 = vpop.permute.xlu0 %542
        %v545 = vmul.f32 %v539, %v543
        %v546 = vpack.c.bf16 %v545, %v545
        %vm547 = vcmask 60416
        %548 = vst.msk [vmem:[%s259] sm:$0xf] %vm547, %v546
        %v549 = vld [vmem:[%s471] sm:$0xff]
        %v550 = vrcp.pop %v549
        %v551 = vld [vmem:[%s479] sm:$0xff]
        %553 = vset.pattern.permute.xlu0 0
        %554 = vperm.xlu0 %553, %v550
        %v555 = vpop.permute.xlu0 %554
        %v557 = vmul.f32 %v551, %v555
        %v558 = vpack.c.bf16 %v557, %v557
        %v560 = vunpack.c.l.b16 %v558
        %v561 = vpack.c.b16 %v560, %v560
        %562 = vrot.lane.b32.xlu0 %v561, 8
        %v563 = vpop.permute.xlu0 %562
        %vm565 = vcmask 126016
        %566 = vst.msk [vmem:[%s259] sm:$0xf] %vm565, %v563
      $region40: #{attention_forward.4} parent=31 // pred_fallthru
        _
      %p567 = scmp.lt.s32.totalorder %s19, 3
      %s568 = scalar_select %p567, %s19, 3
      %p569 = scmp.lt.s32.totalorder %s20, 0
      %s570 = scalar_select %p569, %s20, 0
      %s571 = sadd.s32 %s570, %s568
      %s572 = smul.addr %s571, 4
      %s573 = scalar_lea.vmem %s3, %s572
      // Predicated region
      $region41: #{attention_forward.4} parent=31 // pred_check
        %p574 = pneg %p137
      $region42: #{attention_forward.4} parent=31 // pred_check_branch
        %576 = sbr.rel (%p574) target = $region44
      $region43: #{attention_forward.4} parent=31 // pred_region
        _
      $region44: #{attention_forward.4} parent=31 // pred_fallthru
        _
    $region32: #{attention_forward.4} parent=5 // pred_fallthru
      _
    %p577 = scmp.le.s32.totalorder 2, %s9
    // Predicated region
    $region45: #{attention_forward.4} parent=5 // pred_check
      %p578 = pneg %p577
    $region46: #{attention_forward.4} parent=5 // pred_check_branch
      %580 = sbr.rel (%p578) target = $region48
    $region47: #{attention_forward.4} parent=5 // pred_region
      %s581 = ssub.s32 %s9, 2
      // Predicated region
      $region49: #{attention_forward.4} parent=47 // pred_check
        %p582 = pneg %p143
      $region50: #{attention_forward.4} parent=47 // pred_check_branch
        %584 = sbr.rel (%p582) target = $region52
      $region51: #{attention_forward.4} parent=47 // pred_region
        %p585 = scmp.lt.s32.totalorder %s22, 3
        %s586 = scalar_select %p585, %s22, 3
        %p587 = scmp.lt.s32.totalorder %s23, 0
        %s588 = scalar_select %p587, %s23, 0
        %s589 = sadd.s32 %s588, %s586
        %s590 = smul.addr %s589, 4
        %s591 = scalar_lea.vmem %s3, %s590
      $region52: #{attention_forward.4} parent=47 // pred_fallthru
        _
    $region48: #{attention_forward.4} parent=5 // pred_fallthru
      _
  $region6: #{attention_forward.4} parent=0 // loop_footer
    %s13 = sadd.s32 1, %s9
  $region7: #{attention_forward.4} parent=0 // loop_footer_branch
    %8 = sbr.rel target = $region3
  $region8: #{attention_forward.4} parent=0 // loop_exit
    _

</llo_original>
